<compile_context>
chip_gen: v5e
topology: v5e:2x2
jax: 0.10.0
libtpu: 0.0.40
codegen_flags: <defaults>
</compile_context>

<pallas_src>
import jax
import jax.numpy as jnp
from jax.experimental import pallas as pl
from jax.experimental.pallas import tpu as pltpu

# ---------------------------- model hyper-params ----------------------------
D = 32                    # feat_dim (== d_model)
N_HEAD = 2
D_K = D // N_HEAD         # d_k == d_v
NUM_NEIGHBORS = 8         # neighbors per node
ND = NUM_NEIGHBORS * D    # lane-dense neighbor width (256)
NUM_LAYERS = 2            # TGAN num_layers (recursion depth)
NUM_NODES = 16            # rows of n_feat (node raw embedding table)

TM_MAX = 1024             # max rows per grid step
SPLIT_MIN = 256           # above this, force >= 2 grid steps (v7x: 2 TCs)

LN_EPS = 1e-5             # torch.nn.LayerNorm default
LEAKY_SLOPE = 0.01        # MergeLayer LeakyReLU default negative_slope
MASK_FILL = -1e10         # masked_fill value in ScaledDotProductAttention


def _round_up(x, m):
    return ((x + m - 1) // m) * m


def _pick_tile(m):
    """Fat single tile for small M; >=2 balanced tiles for large M (v7x TCs)."""
    mp8 = _round_up(m, 8)
    if mp8 <= SPLIT_MIN:
        return mp8
    nsteps = max(2, -(-mp8 // TM_MAX))
    return _round_up(-(-mp8 // nsteps), 8)


# ------------------------------- Pallas kernel -------------------------------
def _attn_layer_kernel(src_ref, seq_ref, mbias_ref,
                       wsrc_ref, g_ref, e_ref, wvf_ref,
                       fcb_ref, lng_ref, lnb_ref,
                       mgwo_ref, mgb_ref,
                       out_ref):
    """One AttnModel layer for a tile of TM nodes.

    src   : (TM, D)        query node features (residual / merger input)
    seq   : (TM, N*D)      lane-dense neighbor features (keys == values)
    mbias : (TM, N)        additive mask (MASK_FILL on null neighbors, else 0)
    wsrc  : (D, H*N*D + D) [per-head (Wq_h^T Wk_h)/sqrt(d_k) tiled across the
                            N neighbor slots | MergeLayer src-side weight W_s]
    g     : (N*D, N)       0/1 group-sum matrix     (per-neighbor reduction)
    e     : (N, N*D)       0/1 group-broadcast matrix
    wvf   : (H*N*D, D)     per-head Wv_h^T @ Wfc_h, tiled across neighbor slots
    mgwo  : (D, D)         MergeLayer weight for the attention-output half
    """
    src = src_ref[...]                       # (TM, D)
    seq = seq_ref[...]                       # (TM, N*D)
    mbias = mbias_ref[...]                   # (TM, N)

    # One fat MXU issue: per-head q.K precursors (neighbor-tiled) + src-merge.
    r_all = jnp.dot(src, wsrc_ref[...],
                    preferred_element_type=jnp.float32)     # (TM, H*N*D + D)
    src_merge = r_all[:, N_HEAD * ND:]                      # (TM, D)

    fc_out = None
    for h in range(N_HEAD):
        rh_t = r_all[:, h * ND:(h + 1) * ND]                # (TM, N*D)
        prod = seq * rh_t                                   # full-lane VPU op
        s = jnp.dot(prod, g_ref[...],
                    preferred_element_type=jnp.float32)     # (TM, N) scores
        s = s + mbias                                       # additive mask
        s = s - jnp.max(s, axis=-1, keepdims=True)
        p = jnp.exp(s)
        l = jnp.sum(p, axis=-1, keepdims=True)
        p = p * pl.reciprocal(l, approx=False)              # exact softmax
        pb = jnp.dot(p, e_ref[...],
                     preferred_element_type=jnp.float32)    # (TM, N*D)
        wctx = pb * seq                                     # full-lane VPU op
        contrib = jnp.dot(wctx, wvf_ref[h * ND:(h + 1) * ND, :],
                          preferred_element_type=jnp.float32)   # (TM, D)
        fc_out = contrib if fc_out is None else fc_out + contrib

    # fc bias + residual, single-pass LayerNorm(d_model)
    o = fc_out + fcb_ref[...] + src
    mu = jnp.mean(o, axis=-1, keepdims=True)
    ms = jnp.mean(o * o, axis=-1, keepdims=True)
    o = (o - mu) * jax.lax.rsqrt(ms - mu * mu + LN_EPS)
    o = o * lng_ref[...] + lnb_ref[...]

    # MergeLayer: LeakyReLU(cat([o, src]) @ W + b) == o @ W_o + src @ W_s + b
    hm = jnp.dot(o, mgwo_ref[...],
                 preferred_element_type=jnp.float32) + src_merge + mgb_ref[...]
    out_ref[...] = jnp.where(hm > 0.0, hm, LEAKY_SLOPE * hm)


def attn_layer(src_feat, ngh_flat, mask_bias, params):
    """Apply one AttnModel layer via pallas_call (tiled over M)."""
    w_src, wvf_rep, fcb, ln_g, ln_b, mgw_o, mgb = params
    m = src_feat.shape[0]
    tm = _pick_tile(m)
    mp = _round_up(m, tm)
    pad = mp - m
    if pad:
        src_feat = jnp.pad(src_feat, ((0, pad), (0, 0)))
        ngh_flat = jnp.pad(ngh_flat, ((0, pad), (0, 0)))
        mask_bias = jnp.pad(mask_bias, ((0, pad), (0, 0)),
                            constant_values=MASK_FILL)

    # Constant 0/1 reduction / broadcast matrices (idle-MXU reductions).
    g_mat = jnp.repeat(jnp.eye(NUM_NEIGHBORS, dtype=jnp.float32), D, axis=0)
    e_mat = jnp.repeat(jnp.eye(NUM_NEIGHBORS, dtype=jnp.float32), D, axis=1)

    weights = (w_src, g_mat, e_mat, wvf_rep, fcb, ln_g, ln_b, mgw_o, mgb)
    in_specs = [
        pl.BlockSpec((tm, D), lambda i: (i, 0)),
        pl.BlockSpec((tm, ND), lambda i: (i, 0)),
        pl.BlockSpec((tm, NUM_NEIGHBORS), lambda i: (i, 0)),
    ] + [pl.BlockSpec(w.shape, lambda i: (0, 0)) for w in weights]

    out = pl.pallas_call(
        _attn_layer_kernel,
        out_shape=jax.ShapeDtypeStruct((mp, D), jnp.float32),
        grid=(mp // tm,),
        in_specs=in_specs,
        out_specs=pl.BlockSpec((tm, D), lambda i: (i, 0)),
        compiler_params=pltpu.CompilerParams(
            dimension_semantics=("parallel",),
            vmem_limit_bytes=48 * 1024 * 1024),
    )(src_feat, ngh_flat, mask_bias, *weights)
    return out[:m]


# ------------------------------ parameter setup ------------------------------
def make_params(key):
    def lin(k, shape, scale=0.1):
        return jax.random.normal(k, shape, jnp.float32) * scale

    keys = jax.random.split(key, NUM_LAYERS + 1)
    inv_temp = 1.0 / (float(D_K) ** 0.5)
    layers = []
    for l in range(NUM_LAYERS):
        kk = jax.random.split(keys[l], 5)
        wq_t = lin(kk[0], (D, N_HEAD * D_K))       # src @ wq_t == src @ Wq^T
        wk = lin(kk[1], (N_HEAD * D_K, D))         # torch layout [out, in]
        wv_t = lin(kk[2], (D, N_HEAD * D_K))
        fcw_t = lin(kk[3], (N_HEAD * D_K, D))      # fc.weight^T
        fcb = jnp.zeros((1, D), jnp.float32)
        ln_g = jnp.ones((1, D), jnp.float32)       # LayerNorm affine init
        ln_b = jnp.zeros((1, D), jnp.float32)
        mgw_t = lin(kk[4], (2 * D, D))             # MergeLayer fc1 (W^T)
        mgb = jnp.zeros((1, D), jnp.float32)

        # Host-side algebraic fusion (exact — all ops are linear):
        #   wqk_h = (Wq_h^T @ Wk_h) / sqrt(d_k)     (D, D)
        #   wvf_h =  Wv_h^T @ Wfc_h                 (D, D)
        wqk_h = [wq_t[:, h * D_K:(h + 1) * D_K] @ wk[h * D_K:(h + 1) * D_K, :]
                 * inv_temp for h in range(N_HEAD)]
        wvf_h = [wv_t[:, h * D_K:(h + 1) * D_K] @ fcw_t[h * D_K:(h + 1) * D_K, :]
                 for h in range(N_HEAD)]

        # Lane-dense packing: tile each head's wqk across the N neighbor slots
        # and append the MergeLayer src-side weight block (one wide matmul).
        w_src = jnp.concatenate(
            [jnp.tile(w, (1, NUM_NEIGHBORS)) for w in wqk_h] + [mgw_t[D:]],
            axis=1)                                          # (D, H*N*D + D)
        wvf_rep = jnp.concatenate(
            [jnp.tile(w, (NUM_NEIGHBORS, 1)) for w in wvf_h],
            axis=0)                                          # (H*N*D, D)
        mgw_o = mgw_t[:D]                                    # (D, D)

        layers.append((w_src, wvf_rep, fcb, ln_g, ln_b, mgw_o, mgb))

    n_feat = jax.random.normal(keys[NUM_LAYERS], (NUM_NODES, D), jnp.float32)
    n_feat = n_feat.at[0].set(0.0)                 # padding_idx=0 row
    return n_feat, layers


# ------------------------- TGAN forward (glue in JAX) -------------------------
def get_temporal_neighbor(idx, t):
    """Deterministic synthetic stand-in for ngh_finder.get_temporal_neighbor."""
    j = jnp.arange(NUM_NEIGHBORS, dtype=jnp.int32)
    ngh = (idx[:, None] * 7 + j[None, :] * 3 + 1) % NUM_NODES
    ngh = jnp.where((idx[:, None] + j[None, :]) % 3 == 0, 0, ngh)  # some nulls
    ngh_t = t[:, None] - (j[None, :].astype(jnp.float32) + 1.0)
    return ngh.astype(jnp.int32), ngh_t.astype(jnp.float32)


def tem_conv(n_feat, layers, idx, t, curr_layer):
    if curr_layer == 0:
        return jnp.take(n_feat, idx, axis=0)       # node_raw_embed lookup
    m = idx.shape[0]
    ngh, ngh_t = get_temporal_neighbor(idx, t)
    # Batch the src rows and neighbor rows through the lower level in ONE pass.
    all_idx = jnp.concatenate([idx, ngh.reshape(-1)], axis=0)
    all_t = jnp.concatenate([t, ngh_t.reshape(-1)], axis=0)
    all_feat = tem_conv(n_feat, layers, all_idx, all_t, curr_layer - 1)
    src_feat = all_feat[:m]
    ngh_flat = all_feat[m:].reshape(m, ND)         # lane-dense (m, N*D)
    mask_bias = jnp.where(ngh == 0, jnp.float32(MASK_FILL),
                          jnp.float32(0.0))        # additive mask, (m, N)
    return attn_layer(src_feat, ngh_flat, mask_bias, layers[curr_layer - 1])


@jax.jit
def tgan_forward(n_feat, layers, src_idx, tgt_idx, cut_t):
    # Batch the src and tgt paths through one tem_conv (halves kernel launches).
    b = src_idx.shape[0]
    idx = jnp.concatenate([src_idx, tgt_idx], axis=0)
    t = jnp.concatenate([cut_t, cut_t], axis=0)
    embed = tem_conv(n_feat, layers, idx, t, NUM_LAYERS)
    return jnp.concatenate([embed[:b], embed[b:]], axis=1)   # link: [B, 2D]


# ------------------------------------ main ------------------------------------
if __name__ == "__main__":
    key = jax.random.PRNGKey(0)
    kp, ki, kj, kt = jax.random.split(key, 4)
    n_feat, layers = make_params(kp)

    B = 2
    src_idx = jax.random.randint(ki, (B,), 1, NUM_NODES).astype(jnp.int32)
    tgt_idx = jax.random.randint(kj, (B,), 1, NUM_NODES).astype(jnp.int32)
    cut_t = jax.random.uniform(kt, (B,), jnp.float32, 10.0, 100.0)

    link = tgan_forward(n_feat, layers, src_idx, tgt_idx, cut_t)
    link = jax.block_until_ready(link)
    assert link.shape == (B, 2 * D), link.shape
    assert bool(jnp.all(jnp.isfinite(link)))
    print("KERNEL_OK")
</pallas_src>

<mosaic_0001>
module attributes {stable_mosaic.version = 11 : i64} {
  func.func @_attn_layer_kernel(%arg0: i32, %arg1: memref<40x32xf32, #tpu.memory_space<vmem>>, %arg2: memref<40x256xf32, #tpu.memory_space<vmem>>, %arg3: memref<40x8xf32, #tpu.memory_space<vmem>>, %arg4: memref<32x544xf32, #tpu.memory_space<vmem>>, %arg5: memref<256x8xf32, #tpu.memory_space<vmem>>, %arg6: memref<8x256xf32, #tpu.memory_space<vmem>>, %arg7: memref<512x32xf32, #tpu.memory_space<vmem>>, %arg8: memref<1x32xf32, #tpu.memory_space<vmem>>, %arg9: memref<1x32xf32, #tpu.memory_space<vmem>>, %arg10: memref<1x32xf32, #tpu.memory_space<vmem>>, %arg11: memref<32x32xf32, #tpu.memory_space<vmem>>, %arg12: memref<1x32xf32, #tpu.memory_space<vmem>>, %arg13: memref<40x32xf32, #tpu.memory_space<vmem>>) attributes {dimension_semantics = [#tpu.dimension_semantics<parallel>], iteration_bounds = array<i64: 1>, scalar_prefetch = 0 : i64, scratch_operands = 0 : i64, tpu.core_type = #tpu.core_type<tc>, window_params = [{transform_indices = @transform_0, window_bounds = array<i64: 40, 32>}, {transform_indices = @transform_1, window_bounds = array<i64: 40, 256>}, {transform_indices = @transform_2, window_bounds = array<i64: 40, 8>}, {pipeline_mode = #tpu.pipeline_mode<synchronous>, transform_indices = @transform_3, window_bounds = array<i64: 32, 544>}, {pipeline_mode = #tpu.pipeline_mode<synchronous>, transform_indices = @transform_4, window_bounds = array<i64: 256, 8>}, {pipeline_mode = #tpu.pipeline_mode<synchronous>, transform_indices = @transform_5, window_bounds = array<i64: 8, 256>}, {pipeline_mode = #tpu.pipeline_mode<synchronous>, transform_indices = @transform_6, window_bounds = array<i64: 512, 32>}, {pipeline_mode = #tpu.pipeline_mode<synchronous>, transform_indices = @transform_7, window_bounds = array<i64: 1, 32>}, {pipeline_mode = #tpu.pipeline_mode<synchronous>, transform_indices = @transform_8, window_bounds = array<i64: 1, 32>}, {pipeline_mode = #tpu.pipeline_mode<synchronous>, transform_indices = @transform_9, window_bounds = array<i64: 1, 32>}, {pipeline_mode = #tpu.pipeline_mode<synchronous>, transform_indices = @transform_10, window_bounds = array<i64: 32, 32>}, {pipeline_mode = #tpu.pipeline_mode<synchronous>, transform_indices = @transform_11, window_bounds = array<i64: 1, 32>}, {transform_indices = @transform_12, window_bounds = array<i64: 40, 32>}]} {
    %c0 = arith.constant 0 : index
    %c0_0 = arith.constant 0 : index
    %0 = vector.load %arg1[%c0, %c0_0] : memref<40x32xf32, #tpu.memory_space<vmem>>, vector<40x32xf32>
    %c0_1 = arith.constant 0 : index
    %c0_2 = arith.constant 0 : index
    %1 = vector.load %arg2[%c0_1, %c0_2] : memref<40x256xf32, #tpu.memory_space<vmem>>, vector<40x256xf32>
    %c0_3 = arith.constant 0 : index
    %c0_4 = arith.constant 0 : index
    %2 = vector.load %arg3[%c0_3, %c0_4] : memref<40x8xf32, #tpu.memory_space<vmem>>, vector<40x8xf32>
    %c0_5 = arith.constant 0 : index
    %c0_6 = arith.constant 0 : index
    %3 = vector.load %arg4[%c0_5, %c0_6] : memref<32x544xf32, #tpu.memory_space<vmem>>, vector<32x544xf32>
    %cst = arith.constant dense<0.000000e+00> : vector<40x544xf32>
    %4 = tpu.matmul %0, %3, %cst {dimension_numbers = #tpu.dot_dimension_numbers<[1], [0], [0], [1], [0, 0, 1, 1], [], []>} : vector<40x32xf32>, vector<32x544xf32>, vector<40x544xf32> -> vector<40x544xf32>
    %5 = vector.extract_strided_slice %4 {offsets = [0, 512], sizes = [40, 32], strides = [1, 1]} : vector<40x544xf32> to vector<40x32xf32>
    %6 = vector.extract_strided_slice %4 {offsets = [0, 0], sizes = [40, 256], strides = [1, 1]} : vector<40x544xf32> to vector<40x256xf32>
    %7 = arith.mulf %1, %6 : vector<40x256xf32>
    %c0_7 = arith.constant 0 : index
    %c0_8 = arith.constant 0 : index
    %8 = vector.load %arg5[%c0_7, %c0_8] : memref<256x8xf32, #tpu.memory_space<vmem>>, vector<256x8xf32>
    %cst_9 = arith.constant dense<0.000000e+00> : vector<40x8xf32>
    %9 = tpu.matmul %7, %8, %cst_9 {dimension_numbers = #tpu.dot_dimension_numbers<[1], [0], [0], [1], [0, 0, 1, 1], [], []>} : vector<40x256xf32>, vector<256x8xf32>, vector<40x8xf32> -> vector<40x8xf32>
    %10 = arith.addf %9, %2 : vector<40x8xf32>
    %cst_10 = arith.constant dense<0xFF800000> : vector<40xf32>
    %11 = vector.multi_reduction <maximumf>, %10, %cst_10 [1] : vector<40x8xf32> to vector<40xf32>
    %12 = vector.shape_cast %11 : vector<40xf32> to vector<40x1xf32>
    %13 = vector.broadcast %12 : vector<40x1xf32> to vector<40x8xf32>
    %14 = arith.subf %10, %13 : vector<40x8xf32>
    %15 = math.exp %14 : vector<40x8xf32>
    %cst_11 = arith.constant dense<0.000000e+00> : vector<40xf32>
    %16 = vector.multi_reduction <add>, %15, %cst_11 [1] : vector<40x8xf32> to vector<40xf32>
    %17 = vector.shape_cast %16 : vector<40xf32> to vector<40x1xf32>
    %18 = tpu.reciprocal %17 : vector<40x1xf32> -> vector<40x1xf32>
    %19 = vector.broadcast %18 : vector<40x1xf32> to vector<40x8xf32>
    %20 = arith.mulf %15, %19 : vector<40x8xf32>
    %c0_12 = arith.constant 0 : index
    %c0_13 = arith.constant 0 : index
    %21 = vector.load %arg6[%c0_12, %c0_13] : memref<8x256xf32, #tpu.memory_space<vmem>>, vector<8x256xf32>
    %cst_14 = arith.constant dense<0.000000e+00> : vector<40x256xf32>
    %22 = tpu.matmul %20, %21, %cst_14 {dimension_numbers = #tpu.dot_dimension_numbers<[1], [0], [0], [1], [0, 0, 1, 1], [], []>} : vector<40x8xf32>, vector<8x256xf32>, vector<40x256xf32> -> vector<40x256xf32>
    %23 = arith.mulf %22, %1 : vector<40x256xf32>
    %c0_15 = arith.constant 0 : index
    %c0_16 = arith.constant 0 : index
    %24 = vector.load %arg7[%c0_15, %c0_16] : memref<512x32xf32, #tpu.memory_space<vmem>>, vector<256x32xf32>
    %cst_17 = arith.constant dense<0.000000e+00> : vector<40x32xf32>
    %25 = tpu.matmul %23, %24, %cst_17 {dimension_numbers = #tpu.dot_dimension_numbers<[1], [0], [0], [1], [0, 0, 1, 1], [], []>} : vector<40x256xf32>, vector<256x32xf32>, vector<40x32xf32> -> vector<40x32xf32>
    %26 = vector.extract_strided_slice %4 {offsets = [0, 256], sizes = [40, 256], strides = [1, 1]} : vector<40x544xf32> to vector<40x256xf32>
    %27 = arith.mulf %1, %26 : vector<40x256xf32>
    %c0_18 = arith.constant 0 : index
    %c0_19 = arith.constant 0 : index
    %28 = vector.load %arg5[%c0_18, %c0_19] : memref<256x8xf32, #tpu.memory_space<vmem>>, vector<256x8xf32>
    %cst_20 = arith.constant dense<0.000000e+00> : vector<40x8xf32>
    %29 = tpu.matmul %27, %28, %cst_20 {dimension_numbers = #tpu.dot_dimension_numbers<[1], [0], [0], [1], [0, 0, 1, 1], [], []>} : vector<40x256xf32>, vector<256x8xf32>, vector<40x8xf32> -> vector<40x8xf32>
    %30 = arith.addf %29, %2 : vector<40x8xf32>
    %cst_21 = arith.constant dense<0xFF800000> : vector<40xf32>
    %31 = vector.multi_reduction <maximumf>, %30, %cst_21 [1] : vector<40x8xf32> to vector<40xf32>
    %32 = vector.shape_cast %31 : vector<40xf32> to vector<40x1xf32>
    %33 = vector.broadcast %32 : vector<40x1xf32> to vector<40x8xf32>
    %34 = arith.subf %30, %33 : vector<40x8xf32>
    %35 = math.exp %34 : vector<40x8xf32>
    %cst_22 = arith.constant dense<0.000000e+00> : vector<40xf32>
    %36 = vector.multi_reduction <add>, %35, %cst_22 [1] : vector<40x8xf32> to vector<40xf32>
    %37 = vector.shape_cast %36 : vector<40xf32> to vector<40x1xf32>
    %38 = tpu.reciprocal %37 : vector<40x1xf32> -> vector<40x1xf32>
    %39 = vector.broadcast %38 : vector<40x1xf32> to vector<40x8xf32>
    %40 = arith.mulf %35, %39 : vector<40x8xf32>
    %c0_23 = arith.constant 0 : index
    %c0_24 = arith.constant 0 : index
    %41 = vector.load %arg6[%c0_23, %c0_24] : memref<8x256xf32, #tpu.memory_space<vmem>>, vector<8x256xf32>
    %cst_25 = arith.constant dense<0.000000e+00> : vector<40x256xf32>
    %42 = tpu.matmul %40, %41, %cst_25 {dimension_numbers = #tpu.dot_dimension_numbers<[1], [0], [0], [1], [0, 0, 1, 1], [], []>} : vector<40x8xf32>, vector<8x256xf32>, vector<40x256xf32> -> vector<40x256xf32>
    %43 = arith.mulf %42, %1 : vector<40x256xf32>
    %c256 = arith.constant 256 : index
    %c0_26 = arith.constant 0 : index
    %44 = vector.load %arg7[%c256, %c0_26] : memref<512x32xf32, #tpu.memory_space<vmem>>, vector<256x32xf32>
    %cst_27 = arith.constant dense<0.000000e+00> : vector<40x32xf32>
    %45 = tpu.matmul %43, %44, %cst_27 {dimension_numbers = #tpu.dot_dimension_numbers<[1], [0], [0], [1], [0, 0, 1, 1], [], []>} : vector<40x256xf32>, vector<256x32xf32>, vector<40x32xf32> -> vector<40x32xf32>
    %46 = arith.addf %25, %45 : vector<40x32xf32>
    %c0_28 = arith.constant 0 : index
    %c0_29 = arith.constant 0 : index
    %47 = vector.load %arg8[%c0_28, %c0_29] : memref<1x32xf32, #tpu.memory_space<vmem>>, vector<1x32xf32>
    %48 = vector.broadcast %47 : vector<1x32xf32> to vector<40x32xf32>
    %49 = arith.addf %46, %48 : vector<40x32xf32>
    %50 = arith.addf %49, %0 : vector<40x32xf32>
    %cst_30 = arith.constant dense<0.000000e+00> : vector<40xf32>
    %51 = vector.multi_reduction <add>, %50, %cst_30 [1] : vector<40x32xf32> to vector<40xf32>
    %52 = vector.shape_cast %51 : vector<40xf32> to vector<40x1xf32>
    %cst_31 = arith.constant 3.200000e+01 : f32
    %53 = vector.broadcast %cst_31 : f32 to vector<40x1xf32>
    %54 = arith.divf %52, %53 : vector<40x1xf32>
    %55 = arith.mulf %50, %50 : vector<40x32xf32>
    %cst_32 = arith.constant dense<0.000000e+00> : vector<40xf32>
    %56 = vector.multi_reduction <add>, %55, %cst_32 [1] : vector<40x32xf32> to vector<40xf32>
    %57 = vector.shape_cast %56 : vector<40xf32> to vector<40x1xf32>
    %cst_33 = arith.constant 3.200000e+01 : f32
    %58 = vector.broadcast %cst_33 : f32 to vector<40x1xf32>
    %59 = arith.divf %57, %58 : vector<40x1xf32>
    %60 = vector.broadcast %54 : vector<40x1xf32> to vector<40x32xf32>
    %61 = arith.subf %50, %60 : vector<40x32xf32>
    %62 = arith.mulf %54, %54 : vector<40x1xf32>
    %63 = arith.subf %59, %62 : vector<40x1xf32>
    %cst_34 = arith.constant 9.99999974E-6 : f32
    %64 = vector.broadcast %cst_34 : f32 to vector<40x1xf32>
    %65 = arith.addf %63, %64 : vector<40x1xf32>
    %66 = math.rsqrt %65 : vector<40x1xf32>
    %67 = vector.broadcast %66 : vector<40x1xf32> to vector<40x32xf32>
    %68 = arith.mulf %61, %67 : vector<40x32xf32>
    %c0_35 = arith.constant 0 : index
    %c0_36 = arith.constant 0 : index
    %69 = vector.load %arg9[%c0_35, %c0_36] : memref<1x32xf32, #tpu.memory_space<vmem>>, vector<1x32xf32>
    %70 = vector.broadcast %69 : vector<1x32xf32> to vector<40x32xf32>
    %71 = arith.mulf %68, %70 : vector<40x32xf32>
    %c0_37 = arith.constant 0 : index
    %c0_38 = arith.constant 0 : index
    %72 = vector.load %arg10[%c0_37, %c0_38] : memref<1x32xf32, #tpu.memory_space<vmem>>, vector<1x32xf32>
    %73 = vector.broadcast %72 : vector<1x32xf32> to vector<40x32xf32>
    %74 = arith.addf %71, %73 : vector<40x32xf32>
    %c0_39 = arith.constant 0 : index
    %c0_40 = arith.constant 0 : index
    %75 = vector.load %arg11[%c0_39, %c0_40] : memref<32x32xf32, #tpu.memory_space<vmem>>, vector<32x32xf32>
    %cst_41 = arith.constant dense<0.000000e+00> : vector<40x32xf32>
    %76 = tpu.matmul %74, %75, %cst_41 {dimension_numbers = #tpu.dot_dimension_numbers<[1], [0], [0], [1], [0, 0, 1, 1], [], []>} : vector<40x32xf32>, vector<32x32xf32>, vector<40x32xf32> -> vector<40x32xf32>
    %77 = arith.addf %76, %5 : vector<40x32xf32>
    %c0_42 = arith.constant 0 : index
    %c0_43 = arith.constant 0 : index
    %78 = vector.load %arg12[%c0_42, %c0_43] : memref<1x32xf32, #tpu.memory_space<vmem>>, vector<1x32xf32>
    %79 = vector.broadcast %78 : vector<1x32xf32> to vector<40x32xf32>
    %80 = arith.addf %77, %79 : vector<40x32xf32>
    %cst_44 = arith.constant 0.000000e+00 : f32
    %81 = vector.broadcast %cst_44 : f32 to vector<40x32xf32>
    %82 = arith.cmpf ogt, %80, %81 : vector<40x32xf32>
    %cst_45 = arith.constant 0.00999999977 : f32
    %83 = vector.broadcast %cst_45 : f32 to vector<40x32xf32>
    %84 = arith.mulf %83, %80 : vector<40x32xf32>
    %85 = arith.select %82, %80, %84 : vector<40x32xi1>, vector<40x32xf32>
    %c0_46 = arith.constant 0 : index
    %c0_47 = arith.constant 0 : index
    %86 = vector.load %arg13[%c0_46, %c0_47] : memref<40x32xf32, #tpu.memory_space<vmem>>, vector<40x32xf32>
    tpu.vector_store %arg13[%c0_46, %c0_47], %85 {strides = array<i32>} : memref<40x32xf32, #tpu.memory_space<vmem>>, vector<40x32xf32>,
    return
  }
  func.func @transform_0(%arg0: i32) -> (i32, i32) {
    %c0_i32 = arith.constant 0 : i32
    %c0_i32_0 = arith.constant 0 : i32
    return %arg0, %c0_i32 : i32, i32
  }
  func.func @transform_1(%arg0: i32) -> (i32, i32) {
    %c0_i32 = arith.constant 0 : i32
    %c0_i32_0 = arith.constant 0 : i32
    return %arg0, %c0_i32 : i32, i32
  }
  func.func @transform_2(%arg0: i32) -> (i32, i32) {
    %c0_i32 = arith.constant 0 : i32
    %c0_i32_0 = arith.constant 0 : i32
    return %arg0, %c0_i32 : i32, i32
  }
  func.func @transform_3(%arg0: i32) -> (i32, i32) {
    %c0_i32 = arith.constant 0 : i32
    %c0_i32_0 = arith.constant 0 : i32
    %c0_i32_1 = arith.constant 0 : i32
    return %c0_i32, %c0_i32_0 : i32, i32
  }
  func.func @transform_4(%arg0: i32) -> (i32, i32) {
    %c0_i32 = arith.constant 0 : i32
    %c0_i32_0 = arith.constant 0 : i32
    %c0_i32_1 = arith.constant 0 : i32
    return %c0_i32, %c0_i32_0 : i32, i32
  }
  func.func @transform_5(%arg0: i32) -> (i32, i32) {
    %c0_i32 = arith.constant 0 : i32
    %c0_i32_0 = arith.constant 0 : i32
    %c0_i32_1 = arith.constant 0 : i32
    return %c0_i32, %c0_i32_0 : i32, i32
  }
  func.func @transform_6(%arg0: i32) -> (i32, i32) {
    %c0_i32 = arith.constant 0 : i32
    %c0_i32_0 = arith.constant 0 : i32
    %c0_i32_1 = arith.constant 0 : i32
    return %c0_i32, %c0_i32_0 : i32, i32
  }
  func.func @transform_7(%arg0: i32) -> (i32, i32) {
    %c0_i32 = arith.constant 0 : i32
    %c0_i32_0 = arith.constant 0 : i32
    %c0_i32_1 = arith.constant 0 : i32
    return %c0_i32, %c0_i32_0 : i32, i32
  }
  func.func @transform_8(%arg0: i32) -> (i32, i32) {
    %c0_i32 = arith.constant 0 : i32
    %c0_i32_0 = arith.constant 0 : i32
    %c0_i32_1 = arith.constant 0 : i32
    return %c0_i32, %c0_i32_0 : i32, i32
  }
  func.func @transform_9(%arg0: i32) -> (i32, i32) {
    %c0_i32 = arith.constant 0 : i32
    %c0_i32_0 = arith.constant 0 : i32
    %c0_i32_1 = arith.constant 0 : i32
    return %c0_i32, %c0_i32_0 : i32, i32
  }
  func.func @transform_10(%arg0: i32) -> (i32, i32) {
    %c0_i32 = arith.constant 0 : i32
    %c0_i32_0 = arith.constant 0 : i32
    %c0_i32_1 = arith.constant 0 : i32
    return %c0_i32, %c0_i32_0 : i32, i32
  }
  func.func @transform_11(%arg0: i32) -> (i32, i32) {
    %c0_i32 = arith.constant 0 : i32
    %c0_i32_0 = arith.constant 0 : i32
    %c0_i32_1 = arith.constant 0 : i32
    return %c0_i32, %c0_i32_0 : i32, i32
  }
  func.func @transform_12(%arg0: i32) -> (i32, i32) {
    %c0_i32 = arith.constant 0 : i32
    %c0_i32_0 = arith.constant 0 : i32
    return %arg0, %c0_i32 : i32, i32
  }
}

module attributes {stable_mosaic.version = 11 : i64} {
  func.func @_attn_layer_kernel(%arg0: i32, %arg1: memref<8x32xf32, #tpu.memory_space<vmem>>, %arg2: memref<8x256xf32, #tpu.memory_space<vmem>>, %arg3: memref<8x8xf32, #tpu.memory_space<vmem>>, %arg4: memref<32x544xf32, #tpu.memory_space<vmem>>, %arg5: memref<256x8xf32, #tpu.memory_space<vmem>>, %arg6: memref<8x256xf32, #tpu.memory_space<vmem>>, %arg7: memref<512x32xf32, #tpu.memory_space<vmem>>, %arg8: memref<1x32xf32, #tpu.memory_space<vmem>>, %arg9: memref<1x32xf32, #tpu.memory_space<vmem>>, %arg10: memref<1x32xf32, #tpu.memory_space<vmem>>, %arg11: memref<32x32xf32, #tpu.memory_space<vmem>>, %arg12: memref<1x32xf32, #tpu.memory_space<vmem>>, %arg13: memref<8x32xf32, #tpu.memory_space<vmem>>) attributes {dimension_semantics = [#tpu.dimension_semantics<parallel>], iteration_bounds = array<i64: 1>, scalar_prefetch = 0 : i64, scratch_operands = 0 : i64, tpu.core_type = #tpu.core_type<tc>, window_params = [{transform_indices = @transform_0, window_bounds = array<i64: 8, 32>}, {transform_indices = @transform_1, window_bounds = array<i64: 8, 256>}, {transform_indices = @transform_2, window_bounds = array<i64: 8, 8>}, {pipeline_mode = #tpu.pipeline_mode<synchronous>, transform_indices = @transform_3, window_bounds = array<i64: 32, 544>}, {pipeline_mode = #tpu.pipeline_mode<synchronous>, transform_indices = @transform_4, window_bounds = array<i64: 256, 8>}, {pipeline_mode = #tpu.pipeline_mode<synchronous>, transform_indices = @transform_5, window_bounds = array<i64: 8, 256>}, {pipeline_mode = #tpu.pipeline_mode<synchronous>, transform_indices = @transform_6, window_bounds = array<i64: 512, 32>}, {pipeline_mode = #tpu.pipeline_mode<synchronous>, transform_indices = @transform_7, window_bounds = array<i64: 1, 32>}, {pipeline_mode = #tpu.pipeline_mode<synchronous>, transform_indices = @transform_8, window_bounds = array<i64: 1, 32>}, {pipeline_mode = #tpu.pipeline_mode<synchronous>, transform_indices = @transform_9, window_bounds = array<i64: 1, 32>}, {pipeline_mode = #tpu.pipeline_mode<synchronous>, transform_indices = @transform_10, window_bounds = array<i64: 32, 32>}, {pipeline_mode = #tpu.pipeline_mode<synchronous>, transform_indices = @transform_11, window_bounds = array<i64: 1, 32>}, {transform_indices = @transform_12, window_bounds = array<i64: 8, 32>}]} {
    %c0 = arith.constant 0 : index
    %c0_0 = arith.constant 0 : index
    %0 = vector.load %arg1[%c0, %c0_0] : memref<8x32xf32, #tpu.memory_space<vmem>>, vector<8x32xf32>
    %c0_1 = arith.constant 0 : index
    %c0_2 = arith.constant 0 : index
    %1 = vector.load %arg2[%c0_1, %c0_2] : memref<8x256xf32, #tpu.memory_space<vmem>>, vector<8x256xf32>
    %c0_3 = arith.constant 0 : index
    %c0_4 = arith.constant 0 : index
    %2 = vector.load %arg3[%c0_3, %c0_4] : memref<8x8xf32, #tpu.memory_space<vmem>>, vector<8x8xf32>
    %c0_5 = arith.constant 0 : index
    %c0_6 = arith.constant 0 : index
    %3 = vector.load %arg4[%c0_5, %c0_6] : memref<32x544xf32, #tpu.memory_space<vmem>>, vector<32x544xf32>
    %cst = arith.constant dense<0.000000e+00> : vector<8x544xf32>
    %4 = tpu.matmul %0, %3, %cst {dimension_numbers = #tpu.dot_dimension_numbers<[1], [0], [0], [1], [0, 0, 1, 1], [], []>} : vector<8x32xf32>, vector<32x544xf32>, vector<8x544xf32> -> vector<8x544xf32>
    %5 = vector.extract_strided_slice %4 {offsets = [0, 512], sizes = [8, 32], strides = [1, 1]} : vector<8x544xf32> to vector<8x32xf32>
    %6 = vector.extract_strided_slice %4 {offsets = [0, 0], sizes = [8, 256], strides = [1, 1]} : vector<8x544xf32> to vector<8x256xf32>
    %7 = arith.mulf %1, %6 : vector<8x256xf32>
    %c0_7 = arith.constant 0 : index
    %c0_8 = arith.constant 0 : index
    %8 = vector.load %arg5[%c0_7, %c0_8] : memref<256x8xf32, #tpu.memory_space<vmem>>, vector<256x8xf32>
    %cst_9 = arith.constant dense<0.000000e+00> : vector<8x8xf32>
    %9 = tpu.matmul %7, %8, %cst_9 {dimension_numbers = #tpu.dot_dimension_numbers<[1], [0], [0], [1], [0, 0, 1, 1], [], []>} : vector<8x256xf32>, vector<256x8xf32>, vector<8x8xf32> -> vector<8x8xf32>
    %10 = arith.addf %9, %2 : vector<8x8xf32>
    %cst_10 = arith.constant dense<0xFF800000> : vector<8xf32>
    %11 = vector.multi_reduction <maximumf>, %10, %cst_10 [1] : vector<8x8xf32> to vector<8xf32>
    %12 = vector.shape_cast %11 : vector<8xf32> to vector<8x1xf32>
    %13 = vector.broadcast %12 : vector<8x1xf32> to vector<8x8xf32>
    %14 = arith.subf %10, %13 : vector<8x8xf32>
    %15 = math.exp %14 : vector<8x8xf32>
    %cst_11 = arith.constant dense<0.000000e+00> : vector<8xf32>
    %16 = vector.multi_reduction <add>, %15, %cst_11 [1] : vector<8x8xf32> to vector<8xf32>
    %17 = vector.shape_cast %16 : vector<8xf32> to vector<8x1xf32>
    %18 = tpu.reciprocal %17 : vector<8x1xf32> -> vector<8x1xf32>
    %19 = vector.broadcast %18 : vector<8x1xf32> to vector<8x8xf32>
    %20 = arith.mulf %15, %19 : vector<8x8xf32>
    %c0_12 = arith.constant 0 : index
    %c0_13 = arith.constant 0 : index
    %21 = vector.load %arg6[%c0_12, %c0_13] : memref<8x256xf32, #tpu.memory_space<vmem>>, vector<8x256xf32>
    %cst_14 = arith.constant dense<0.000000e+00> : vector<8x256xf32>
    %22 = tpu.matmul %20, %21, %cst_14 {dimension_numbers = #tpu.dot_dimension_numbers<[1], [0], [0], [1], [0, 0, 1, 1], [], []>} : vector<8x8xf32>, vector<8x256xf32>, vector<8x256xf32> -> vector<8x256xf32>
    %23 = arith.mulf %22, %1 : vector<8x256xf32>
    %c0_15 = arith.constant 0 : index
    %c0_16 = arith.constant 0 : index
    %24 = vector.load %arg7[%c0_15, %c0_16] : memref<512x32xf32, #tpu.memory_space<vmem>>, vector<256x32xf32>
    %cst_17 = arith.constant dense<0.000000e+00> : vector<8x32xf32>
    %25 = tpu.matmul %23, %24, %cst_17 {dimension_numbers = #tpu.dot_dimension_numbers<[1], [0], [0], [1], [0, 0, 1, 1], [], []>} : vector<8x256xf32>, vector<256x32xf32>, vector<8x32xf32> -> vector<8x32xf32>
    %26 = vector.extract_strided_slice %4 {offsets = [0, 256], sizes = [8, 256], strides = [1, 1]} : vector<8x544xf32> to vector<8x256xf32>
    %27 = arith.mulf %1, %26 : vector<8x256xf32>
    %c0_18 = arith.constant 0 : index
    %c0_19 = arith.constant 0 : index
    %28 = vector.load %arg5[%c0_18, %c0_19] : memref<256x8xf32, #tpu.memory_space<vmem>>, vector<256x8xf32>
    %cst_20 = arith.constant dense<0.000000e+00> : vector<8x8xf32>
    %29 = tpu.matmul %27, %28, %cst_20 {dimension_numbers = #tpu.dot_dimension_numbers<[1], [0], [0], [1], [0, 0, 1, 1], [], []>} : vector<8x256xf32>, vector<256x8xf32>, vector<8x8xf32> -> vector<8x8xf32>
    %30 = arith.addf %29, %2 : vector<8x8xf32>
    %cst_21 = arith.constant dense<0xFF800000> : vector<8xf32>
    %31 = vector.multi_reduction <maximumf>, %30, %cst_21 [1] : vector<8x8xf32> to vector<8xf32>
    %32 = vector.shape_cast %31 : vector<8xf32> to vector<8x1xf32>
    %33 = vector.broadcast %32 : vector<8x1xf32> to vector<8x8xf32>
    %34 = arith.subf %30, %33 : vector<8x8xf32>
    %35 = math.exp %34 : vector<8x8xf32>
    %cst_22 = arith.constant dense<0.000000e+00> : vector<8xf32>
    %36 = vector.multi_reduction <add>, %35, %cst_22 [1] : vector<8x8xf32> to vector<8xf32>
    %37 = vector.shape_cast %36 : vector<8xf32> to vector<8x1xf32>
    %38 = tpu.reciprocal %37 : vector<8x1xf32> -> vector<8x1xf32>
    %39 = vector.broadcast %38 : vector<8x1xf32> to vector<8x8xf32>
    %40 = arith.mulf %35, %39 : vector<8x8xf32>
    %c0_23 = arith.constant 0 : index
    %c0_24 = arith.constant 0 : index
    %41 = vector.load %arg6[%c0_23, %c0_24] : memref<8x256xf32, #tpu.memory_space<vmem>>, vector<8x256xf32>
    %cst_25 = arith.constant dense<0.000000e+00> : vector<8x256xf32>
    %42 = tpu.matmul %40, %41, %cst_25 {dimension_numbers = #tpu.dot_dimension_numbers<[1], [0], [0], [1], [0, 0, 1, 1], [], []>} : vector<8x8xf32>, vector<8x256xf32>, vector<8x256xf32> -> vector<8x256xf32>
    %43 = arith.mulf %42, %1 : vector<8x256xf32>
    %c256 = arith.constant 256 : index
    %c0_26 = arith.constant 0 : index
    %44 = vector.load %arg7[%c256, %c0_26] : memref<512x32xf32, #tpu.memory_space<vmem>>, vector<256x32xf32>
    %cst_27 = arith.constant dense<0.000000e+00> : vector<8x32xf32>
    %45 = tpu.matmul %43, %44, %cst_27 {dimension_numbers = #tpu.dot_dimension_numbers<[1], [0], [0], [1], [0, 0, 1, 1], [], []>} : vector<8x256xf32>, vector<256x32xf32>, vector<8x32xf32> -> vector<8x32xf32>
    %46 = arith.addf %25, %45 : vector<8x32xf32>
    %c0_28 = arith.constant 0 : index
    %c0_29 = arith.constant 0 : index
    %47 = vector.load %arg8[%c0_28, %c0_29] : memref<1x32xf32, #tpu.memory_space<vmem>>, vector<1x32xf32>
    %48 = vector.broadcast %47 : vector<1x32xf32> to vector<8x32xf32>
    %49 = arith.addf %46, %48 : vector<8x32xf32>
    %50 = arith.addf %49, %0 : vector<8x32xf32>
    %cst_30 = arith.constant dense<0.000000e+00> : vector<8xf32>
    %51 = vector.multi_reduction <add>, %50, %cst_30 [1] : vector<8x32xf32> to vector<8xf32>
    %52 = vector.shape_cast %51 : vector<8xf32> to vector<8x1xf32>
    %cst_31 = arith.constant 3.200000e+01 : f32
    %53 = vector.broadcast %cst_31 : f32 to vector<8x1xf32>
    %54 = arith.divf %52, %53 : vector<8x1xf32>
    %55 = arith.mulf %50, %50 : vector<8x32xf32>
    %cst_32 = arith.constant dense<0.000000e+00> : vector<8xf32>
    %56 = vector.multi_reduction <add>, %55, %cst_32 [1] : vector<8x32xf32> to vector<8xf32>
    %57 = vector.shape_cast %56 : vector<8xf32> to vector<8x1xf32>
    %cst_33 = arith.constant 3.200000e+01 : f32
    %58 = vector.broadcast %cst_33 : f32 to vector<8x1xf32>
    %59 = arith.divf %57, %58 : vector<8x1xf32>
    %60 = vector.broadcast %54 : vector<8x1xf32> to vector<8x32xf32>
    %61 = arith.subf %50, %60 : vector<8x32xf32>
    %62 = arith.mulf %54, %54 : vector<8x1xf32>
    %63 = arith.subf %59, %62 : vector<8x1xf32>
    %cst_34 = arith.constant 9.99999974E-6 : f32
    %64 = vector.broadcast %cst_34 : f32 to vector<8x1xf32>
    %65 = arith.addf %63, %64 : vector<8x1xf32>
    %66 = math.rsqrt %65 : vector<8x1xf32>
    %67 = vector.broadcast %66 : vector<8x1xf32> to vector<8x32xf32>
    %68 = arith.mulf %61, %67 : vector<8x32xf32>
    %c0_35 = arith.constant 0 : index
    %c0_36 = arith.constant 0 : index
    %69 = vector.load %arg9[%c0_35, %c0_36] : memref<1x32xf32, #tpu.memory_space<vmem>>, vector<1x32xf32>
    %70 = vector.broadcast %69 : vector<1x32xf32> to vector<8x32xf32>
    %71 = arith.mulf %68, %70 : vector<8x32xf32>
    %c0_37 = arith.constant 0 : index
    %c0_38 = arith.constant 0 : index
    %72 = vector.load %arg10[%c0_37, %c0_38] : memref<1x32xf32, #tpu.memory_space<vmem>>, vector<1x32xf32>
    %73 = vector.broadcast %72 : vector<1x32xf32> to vector<8x32xf32>
    %74 = arith.addf %71, %73 : vector<8x32xf32>
    %c0_39 = arith.constant 0 : index
    %c0_40 = arith.constant 0 : index
    %75 = vector.load %arg11[%c0_39, %c0_40] : memref<32x32xf32, #tpu.memory_space<vmem>>, vector<32x32xf32>
    %cst_41 = arith.constant dense<0.000000e+00> : vector<8x32xf32>
    %76 = tpu.matmul %74, %75, %cst_41 {dimension_numbers = #tpu.dot_dimension_numbers<[1], [0], [0], [1], [0, 0, 1, 1], [], []>} : vector<8x32xf32>, vector<32x32xf32>, vector<8x32xf32> -> vector<8x32xf32>
    %77 = arith.addf %76, %5 : vector<8x32xf32>
    %c0_42 = arith.constant 0 : index
    %c0_43 = arith.constant 0 : index
    %78 = vector.load %arg12[%c0_42, %c0_43] : memref<1x32xf32, #tpu.memory_space<vmem>>, vector<1x32xf32>
    %79 = vector.broadcast %78 : vector<1x32xf32> to vector<8x32xf32>
    %80 = arith.addf %77, %79 : vector<8x32xf32>
    %cst_44 = arith.constant 0.000000e+00 : f32
    %81 = vector.broadcast %cst_44 : f32 to vector<8x32xf32>
    %82 = arith.cmpf ogt, %80, %81 : vector<8x32xf32>
    %cst_45 = arith.constant 0.00999999977 : f32
    %83 = vector.broadcast %cst_45 : f32 to vector<8x32xf32>
    %84 = arith.mulf %83, %80 : vector<8x32xf32>
    %85 = arith.select %82, %80, %84 : vector<8x32xi1>, vector<8x32xf32>
    %c0_46 = arith.constant 0 : index
    %c0_47 = arith.constant 0 : index
    %86 = vector.load %arg13[%c0_46, %c0_47] : memref<8x32xf32, #tpu.memory_space<vmem>>, vector<8x32xf32>
    tpu.vector_store %arg13[%c0_46, %c0_47], %85 {strides = array<i32>} : memref<8x32xf32, #tpu.memory_space<vmem>>, vector<8x32xf32>,
    return
  }
  func.func @transform_0(%arg0: i32) -> (i32, i32) {
    %c0_i32 = arith.constant 0 : i32
    %c0_i32_0 = arith.constant 0 : i32
    return %arg0, %c0_i32 : i32, i32
  }
  func.func @transform_1(%arg0: i32) -> (i32, i32) {
    %c0_i32 = arith.constant 0 : i32
    %c0_i32_0 = arith.constant 0 : i32
    return %arg0, %c0_i32 : i32, i32
  }
  func.func @transform_2(%arg0: i32) -> (i32, i32) {
    %c0_i32 = arith.constant 0 : i32
    %c0_i32_0 = arith.constant 0 : i32
    return %arg0, %c0_i32 : i32, i32
  }
  func.func @transform_3(%arg0: i32) -> (i32, i32) {
    %c0_i32 = arith.constant 0 : i32
    %c0_i32_0 = arith.constant 0 : i32
    %c0_i32_1 = arith.constant 0 : i32
    return %c0_i32, %c0_i32_0 : i32, i32
  }
  func.func @transform_4(%arg0: i32) -> (i32, i32) {
    %c0_i32 = arith.constant 0 : i32
    %c0_i32_0 = arith.constant 0 : i32
    %c0_i32_1 = arith.constant 0 : i32
    return %c0_i32, %c0_i32_0 : i32, i32
  }
  func.func @transform_5(%arg0: i32) -> (i32, i32) {
    %c0_i32 = arith.constant 0 : i32
    %c0_i32_0 = arith.constant 0 : i32
    %c0_i32_1 = arith.constant 0 : i32
    return %c0_i32, %c0_i32_0 : i32, i32
  }
  func.func @transform_6(%arg0: i32) -> (i32, i32) {
    %c0_i32 = arith.constant 0 : i32
    %c0_i32_0 = arith.constant 0 : i32
    %c0_i32_1 = arith.constant 0 : i32
    return %c0_i32, %c0_i32_0 : i32, i32
  }
  func.func @transform_7(%arg0: i32) -> (i32, i32) {
    %c0_i32 = arith.constant 0 : i32
    %c0_i32_0 = arith.constant 0 : i32
    %c0_i32_1 = arith.constant 0 : i32
    return %c0_i32, %c0_i32_0 : i32, i32
  }
  func.func @transform_8(%arg0: i32) -> (i32, i32) {
    %c0_i32 = arith.constant 0 : i32
    %c0_i32_0 = arith.constant 0 : i32
    %c0_i32_1 = arith.constant 0 : i32
    return %c0_i32, %c0_i32_0 : i32, i32
  }
  func.func @transform_9(%arg0: i32) -> (i32, i32) {
    %c0_i32 = arith.constant 0 : i32
    %c0_i32_0 = arith.constant 0 : i32
    %c0_i32_1 = arith.constant 0 : i32
    return %c0_i32, %c0_i32_0 : i32, i32
  }
  func.func @transform_10(%arg0: i32) -> (i32, i32) {
    %c0_i32 = arith.constant 0 : i32
    %c0_i32_0 = arith.constant 0 : i32
    %c0_i32_1 = arith.constant 0 : i32
    return %c0_i32, %c0_i32_0 : i32, i32
  }
  func.func @transform_11(%arg0: i32) -> (i32, i32) {
    %c0_i32 = arith.constant 0 : i32
    %c0_i32_0 = arith.constant 0 : i32
    %c0_i32_1 = arith.constant 0 : i32
    return %c0_i32, %c0_i32_0 : i32, i32
  }
  func.func @transform_12(%arg0: i32) -> (i32, i32) {
    %c0_i32 = arith.constant 0 : i32
    %c0_i32_0 = arith.constant 0 : i32
    return %arg0, %c0_i32 : i32, i32
  }
}

</mosaic_0001>

<llo_original>
// kernel: tgan_forward.2
$region0: #{tgan_forward.2}
  #allocation0 [shape = 'u32[]', space=smem, size = 0x4, offset = 0x4, fixed_abs, tag = 'smem constant byte address 0x4 - core index']
  #allocation1 [shape = 'u32[72,128]{1,0:T(1,128)}', space=vmem, size = 0x9000, scoped, tag = 'internal scratch']
  %s0 = inlined_call_operand.vmem [shape: f32[40,32], index: 0, kind: input, shape index: {}]
  %s1 = inlined_call_operand.vmem [shape: f32[40,256], index: 1, kind: input, shape index: {}]
  %s2 = inlined_call_operand.vmem [shape: f32[40,8], index: 2, kind: input, shape index: {}]
  %s3 = inlined_call_operand.vmem [shape: f32[32,544], index: 3, kind: input, shape index: {}]
  %s4 = inlined_call_operand.vmem [shape: f32[256,8], index: 4, kind: input, shape index: {}]
  %s5 = inlined_call_operand.vmem [shape: f32[8,256], index: 5, kind: input, shape index: {}]
  %s6 = inlined_call_operand.vmem [shape: f32[512,32], index: 6, kind: input, shape index: {}]
  %s7 = inlined_call_operand.vmem [shape: f32[1,32], index: 7, kind: input, shape index: {}]
  %s8 = inlined_call_operand.vmem [shape: f32[1,32], index: 8, kind: input, shape index: {}]
  %s9 = inlined_call_operand.vmem [shape: f32[1,32], index: 9, kind: input, shape index: {}]
  %s10 = inlined_call_operand.vmem [shape: f32[32,32], index: 10, kind: input, shape index: {}]
  %s11 = inlined_call_operand.vmem [shape: f32[1,32], index: 11, kind: input, shape index: {}]
  %s12 = inlined_call_operand.vmem [shape: f32[40,32], index: 12, kind: output, shape index: {}]
  %s13 = sld [smem:[#allocation0]]
  $region58: #{tgan_forward.2} parent=0
    _
  %s15 = ssub.s32 1, %s13
  %s16 = scalar_select 0, %s15, %s13
  // Predicated region
  $region2: #{tgan_forward.2} parent=0 // pred_check
    _
  $region3: #{tgan_forward.2} parent=0 // pred_check_branch
    %18 = sbr.rel (0) target = $region5
  $region4: #{tgan_forward.2} parent=0 // pred_region
    _
  $region5: #{tgan_forward.2} parent=0 // pred_fallthru
    _
  // Predicated region
  $region6: #{tgan_forward.2} parent=0 // pred_check
    _
  $region7: #{tgan_forward.2} parent=0 // pred_check_branch
    %20 = sbr.rel (0) target = $region9
  $region8: #{tgan_forward.2} parent=0 // pred_region
    _
  $region9: #{tgan_forward.2} parent=0 // pred_fallthru
    _
  // Predicated region
  $region10: #{tgan_forward.2} parent=0 // pred_check
    _
  $region11: #{tgan_forward.2} parent=0 // pred_check_branch
    %22 = sbr.rel (0) target = $region13
  $region12: #{tgan_forward.2} parent=0 // pred_region
    _
  $region13: #{tgan_forward.2} parent=0 // pred_fallthru
    _
  // Predicated region
  $region14: #{tgan_forward.2} parent=0 // pred_check
    _
  $region15: #{tgan_forward.2} parent=0 // pred_check_branch
    %24 = sbr.rel (0) target = $region17
  $region16: #{tgan_forward.2} parent=0 // pred_region
    _
  $region17: #{tgan_forward.2} parent=0 // pred_fallthru
    _
  // Predicated region
  $region18: #{tgan_forward.2} parent=0 // pred_check
    _
  $region19: #{tgan_forward.2} parent=0 // pred_check_branch
    %26 = sbr.rel (0) target = $region21
  $region20: #{tgan_forward.2} parent=0 // pred_region
    _
  $region21: #{tgan_forward.2} parent=0 // pred_fallthru
    _
  // Predicated region
  $region22: #{tgan_forward.2} parent=0 // pred_check
    _
  $region23: #{tgan_forward.2} parent=0 // pred_check_branch
    %28 = sbr.rel (0) target = $region25
  $region24: #{tgan_forward.2} parent=0 // pred_region
    _
  $region25: #{tgan_forward.2} parent=0 // pred_fallthru
    _
  // Predicated region
  $region26: #{tgan_forward.2} parent=0 // pred_check
    _
  $region27: #{tgan_forward.2} parent=0 // pred_check_branch
    %30 = sbr.rel (0) target = $region29
  $region28: #{tgan_forward.2} parent=0 // pred_region
    _
  $region29: #{tgan_forward.2} parent=0 // pred_fallthru
    _
  // Predicated region
  $region30: #{tgan_forward.2} parent=0 // pred_check
    _
  $region31: #{tgan_forward.2} parent=0 // pred_check_branch
    %32 = sbr.rel (0) target = $region33
  $region32: #{tgan_forward.2} parent=0 // pred_region
    _
  $region33: #{tgan_forward.2} parent=0 // pred_fallthru
    _
  // Predicated region
  $region34: #{tgan_forward.2} parent=0 // pred_check
    _
  $region35: #{tgan_forward.2} parent=0 // pred_check_branch
    %34 = sbr.rel (0) target = $region37
  $region36: #{tgan_forward.2} parent=0 // pred_region
    _
  $region37: #{tgan_forward.2} parent=0 // pred_fallthru
    _
  // Predicated region
  $region38: #{tgan_forward.2} parent=0 // pred_check
    _
  $region39: #{tgan_forward.2} parent=0 // pred_check_branch
    %36 = sbr.rel (0) target = $region41
  $region40: #{tgan_forward.2} parent=0 // pred_region
    _
  $region41: #{tgan_forward.2} parent=0 // pred_fallthru
    _
  // Predicated region
  $region42: #{tgan_forward.2} parent=0 // pred_check
    _
  $region43: #{tgan_forward.2} parent=0 // pred_check_branch
    %38 = sbr.rel (0) target = $region45
  $region44: #{tgan_forward.2} parent=0 // pred_region
    _
  $region45: #{tgan_forward.2} parent=0 // pred_fallthru
    _
  // Predicated region
  $region46: #{tgan_forward.2} parent=0 // pred_check
    _
  $region47: #{tgan_forward.2} parent=0 // pred_check_branch
    %40 = sbr.rel (0) target = $region49
  $region48: #{tgan_forward.2} parent=0 // pred_region
    _
  $region49: #{tgan_forward.2} parent=0 // pred_fallthru
    _
  %v41 = vld [vmem:[%s0] sm:$0xff]
  %v42 = vld [vmem:[%s0 + $0x8] sm:$0xff]
  %v43 = vld [vmem:[%s0 + $0x10] sm:$0xff]
  %v44 = vld [vmem:[%s0 + $0x18] sm:$0xff]
  %v45 = vld [vmem:[%s0 + $0x20] sm:$0xff]
  %v46 = vld [vmem:[%s1] sm:$0xff]
  %v47 = vld [vmem:[%s1 + $0x8] sm:$0xff]
  %v48 = vld [vmem:[%s1 + $0x10] sm:$0xff]
  %v49 = vld [vmem:[%s1 + $0x18] sm:$0xff]
  %v50 = vld [vmem:[%s1 + $0x20] sm:$0xff]
  %v51 = vld [vmem:[%s1 + $0x28] sm:$0xff]
  %v52 = vld [vmem:[%s1 + $0x30] sm:$0xff]
  %v53 = vld [vmem:[%s1 + $0x38] sm:$0xff]
  %v54 = vld [vmem:[%s1 + $0x40] sm:$0xff]
  %v55 = vld [vmem:[%s1 + $0x48] sm:$0xff]
  %v56 = vld [vmem:[%s2] sm:$0xff]
  %v57 = vld [vmem:[%s2 + $0x8] sm:$0xff]
  %v58 = vld [vmem:[%s2 + $0x10] sm:$0xff]
  %v59 = vld [vmem:[%s2 + $0x18] sm:$0xff]
  %v60 = vld [vmem:[%s2 + $0x20] sm:$0xff]
  %v61 = vld [vmem:[%s3] sm:$0xff]
  %v62 = vld [vmem:[%s3 + $0x8] sm:$0xff]
  %v63 = vld [vmem:[%s3 + $0x10] sm:$0xff]
  %v64 = vld [vmem:[%s3 + $0x18] sm:$0xff]
  %v65 = vld [vmem:[%s3 + $0x20] sm:$0xff]
  %v66 = vld [vmem:[%s3 + $0x28] sm:$0xff]
  %v67 = vld [vmem:[%s3 + $0x30] sm:$0xff]
  %v68 = vld [vmem:[%s3 + $0x38] sm:$0xff]
  %v69 = vld [vmem:[%s3 + $0x40] sm:$0xff]
  %v70 = vld [vmem:[%s3 + $0x48] sm:$0xff]
  %v71 = vld [vmem:[%s3 + $0x50] sm:$0xff]
  %v72 = vld [vmem:[%s3 + $0x58] sm:$0xff]
  %v73 = vld [vmem:[%s3 + $0x60] sm:$0xff]
  %v74 = vld [vmem:[%s3 + $0x68] sm:$0xff]
  %v75 = vld [vmem:[%s3 + $0x70] sm:$0xff]
  %v76 = vld [vmem:[%s3 + $0x78] sm:$0xff]
  %v77 = vld [vmem:[%s3 + $0x80] sm:$0xff]
  %v78 = vld [vmem:[%s3 + $0x88] sm:$0xff]
  %v79 = vld [vmem:[%s3 + $0x90] sm:$0xff]
  %v80 = vld [vmem:[%s3 + $0x98] sm:$0xff]
  %vm81 = vcmask 261120
  %v83 = vsel %vm81, %v41, 0
  %v86 = vsel %vm81, %v42, 0
  %v89 = vsel %vm81, %v43, 0
  %v92 = vsel %vm81, %v44, 0
  %v95 = vsel %vm81, %v45, 0
  %97 = vmatpush.msra.mxu0 0.0
  %98 = vmatpush.msra.mxu0 0.0
  %99 = vmatpush.msra.mxu0 0.0
  %100 = vmatpush.msra.mxu0 0.0
  %101 = vmatpush.msra.mxu0 0.0
  %102 = vmatpush.msra.mxu0 0.0
  %103 = vmatpush.msra.mxu0 0.0
  %104 = vmatpush.msra.mxu0 0.0
  %105 = vmatpush.msra.mxu0 0.0
  %106 = vmatpush.msra.mxu0 0.0
  %107 = vmatpush.msra.mxu0 0.0
  %108 = vmatpush.msra.mxu0 0.0
  %109 = vmatpush.msra.mxu0 %v76
  %110 = vmatpush.msra.mxu0 %v71
  %111 = vmatpush.msra.mxu0 %v66
  %112 = vmatpush.msra.mxu0 %v61
  %113 = vmatmul.f32.gmra.mxu0 %v83
  %v114 = vpop.f32.mrf.mxu0
  %v115 = vadd.f32 0.0, %v114
  %116 = vmatmul.f32.gmra.mxu0 %v86
  %v117 = vpop.f32.mrf.mxu0
  %v118 = vadd.f32 0.0, %v117
  %119 = vmatmul.f32.gmra.mxu0 %v89
  %v120 = vpop.f32.mrf.mxu0
  %v121 = vadd.f32 0.0, %v120
  %122 = vmatmul.f32.gmra.mxu0 %v92
  %v123 = vpop.f32.mrf.mxu0
  %v124 = vadd.f32 0.0, %v123
  %125 = vmatmul.f32.gmra.mxu0 %v95
  %v126 = vpop.f32.mrf.mxu0
  %v127 = vadd.f32 0.0, %v126
  %128 = vdwg.mxu0
  %129 = vmatpush.msra.mxu0 0.0
  %130 = vmatpush.msra.mxu0 0.0
  %131 = vmatpush.msra.mxu0 0.0
  %132 = vmatpush.msra.mxu0 0.0
  %133 = vmatpush.msra.mxu0 0.0
  %134 = vmatpush.msra.mxu0 0.0
  %135 = vmatpush.msra.mxu0 0.0
  %136 = vmatpush.msra.mxu0 0.0
  %137 = vmatpush.msra.mxu0 0.0
  %138 = vmatpush.msra.mxu0 0.0
  %139 = vmatpush.msra.mxu0 0.0
  %140 = vmatpush.msra.mxu0 0.0
  %141 = vmatpush.msra.mxu0 %v77
  %142 = vmatpush.msra.mxu0 %v72
  %143 = vmatpush.msra.mxu0 %v67
  %144 = vmatpush.msra.mxu0 %v62
  %145 = vmatmul.f32.gmra.mxu0 %v83
  %v146 = vpop.f32.mrf.mxu0
  %v147 = vadd.f32 0.0, %v146
  %148 = vmatmul.f32.gmra.mxu0 %v86
  %v149 = vpop.f32.mrf.mxu0
  %v150 = vadd.f32 0.0, %v149
  %151 = vmatmul.f32.gmra.mxu0 %v89
  %v152 = vpop.f32.mrf.mxu0
  %v153 = vadd.f32 0.0, %v152
  %154 = vmatmul.f32.gmra.mxu0 %v92
  %v155 = vpop.f32.mrf.mxu0
  %v156 = vadd.f32 0.0, %v155
  %157 = vmatmul.f32.gmra.mxu0 %v95
  %v158 = vpop.f32.mrf.mxu0
  %v159 = vadd.f32 0.0, %v158
  %160 = vdwg.mxu0
  %161 = vmatpush.msra.mxu0 0.0
  %162 = vmatpush.msra.mxu0 0.0
  %163 = vmatpush.msra.mxu0 0.0
  %164 = vmatpush.msra.mxu0 0.0
  %165 = vmatpush.msra.mxu0 0.0
  %166 = vmatpush.msra.mxu0 0.0
  %167 = vmatpush.msra.mxu0 0.0
  %168 = vmatpush.msra.mxu0 0.0
  %169 = vmatpush.msra.mxu0 0.0
  %170 = vmatpush.msra.mxu0 0.0
  %171 = vmatpush.msra.mxu0 0.0
  %172 = vmatpush.msra.mxu0 0.0
  %173 = vmatpush.msra.mxu0 %v78
  %174 = vmatpush.msra.mxu0 %v73
  %175 = vmatpush.msra.mxu0 %v68
  %176 = vmatpush.msra.mxu0 %v63
  %177 = vmatmul.f32.gmra.mxu0 %v83
  %v178 = vpop.f32.mrf.mxu0
  %v179 = vadd.f32 0.0, %v178
  %180 = vmatmul.f32.gmra.mxu0 %v86
  %v181 = vpop.f32.mrf.mxu0
  %v182 = vadd.f32 0.0, %v181
  %183 = vmatmul.f32.gmra.mxu0 %v89
  %v184 = vpop.f32.mrf.mxu0
  %v185 = vadd.f32 0.0, %v184
  %186 = vmatmul.f32.gmra.mxu0 %v92
  %v187 = vpop.f32.mrf.mxu0
  %v188 = vadd.f32 0.0, %v187
  %189 = vmatmul.f32.gmra.mxu0 %v95
  %v190 = vpop.f32.mrf.mxu0
  %v191 = vadd.f32 0.0, %v190
  %192 = vdwg.mxu0
  %193 = vmatpush.msra.mxu0 0.0
  %194 = vmatpush.msra.mxu0 0.0
  %195 = vmatpush.msra.mxu0 0.0
  %196 = vmatpush.msra.mxu0 0.0
  %197 = vmatpush.msra.mxu0 0.0
  %198 = vmatpush.msra.mxu0 0.0
  %199 = vmatpush.msra.mxu0 0.0
  %200 = vmatpush.msra.mxu0 0.0
  %201 = vmatpush.msra.mxu0 0.0
  %202 = vmatpush.msra.mxu0 0.0
  %203 = vmatpush.msra.mxu0 0.0
  %204 = vmatpush.msra.mxu0 0.0
  %205 = vmatpush.msra.mxu0 %v79
  %206 = vmatpush.msra.mxu0 %v74
  %207 = vmatpush.msra.mxu0 %v69
  %208 = vmatpush.msra.mxu0 %v64
  %209 = vmatmul.f32.gmra.mxu0 %v83
  %v210 = vpop.f32.mrf.mxu0
  %v211 = vadd.f32 0.0, %v210
  %212 = vmatmul.f32.gmra.mxu0 %v86
  %v213 = vpop.f32.mrf.mxu0
  %v214 = vadd.f32 0.0, %v213
  %215 = vmatmul.f32.gmra.mxu0 %v89
  %v216 = vpop.f32.mrf.mxu0
  %v217 = vadd.f32 0.0, %v216
  %218 = vmatmul.f32.gmra.mxu0 %v92
  %v219 = vpop.f32.mrf.mxu0
  %v220 = vadd.f32 0.0, %v219
  %221 = vmatmul.f32.gmra.mxu0 %v95
  %v222 = vpop.f32.mrf.mxu0
  %v223 = vadd.f32 0.0, %v222
  %224 = vdwg.mxu0
  %225 = vmatpush.msra.mxu0 0.0
  %226 = vmatpush.msra.mxu0 0.0
  %227 = vmatpush.msra.mxu0 0.0
  %228 = vmatpush.msra.mxu0 0.0
  %229 = vmatpush.msra.mxu0 0.0
  %230 = vmatpush.msra.mxu0 0.0
  %231 = vmatpush.msra.mxu0 0.0
  %232 = vmatpush.msra.mxu0 0.0
  %233 = vmatpush.msra.mxu0 0.0
  %234 = vmatpush.msra.mxu0 0.0
  %235 = vmatpush.msra.mxu0 0.0
  %236 = vmatpush.msra.mxu0 0.0
  %237 = vmatpush.msra.mxu0 %v80
  %238 = vmatpush.msra.mxu0 %v75
  %239 = vmatpush.msra.mxu0 %v70
  %240 = vmatpush.msra.mxu0 %v65
  %241 = vmatmul.f32.gmra.mxu0 %v83
  %v242 = vpop.f32.mrf.mxu0
  %v243 = vadd.f32 0.0, %v242
  %244 = vmatmul.f32.gmra.mxu0 %v86
  %v245 = vpop.f32.mrf.mxu0
  %v246 = vadd.f32 0.0, %v245
  %247 = vmatmul.f32.gmra.mxu0 %v89
  %v248 = vpop.f32.mrf.mxu0
  %v249 = vadd.f32 0.0, %v248
  %250 = vmatmul.f32.gmra.mxu0 %v92
  %v251 = vpop.f32.mrf.mxu0
  %v252 = vadd.f32 0.0, %v251
  %253 = vmatmul.f32.gmra.mxu0 %v95
  %v254 = vpop.f32.mrf.mxu0
  %v255 = vadd.f32 0.0, %v254
  %256 = vdwg.mxu0
  %v257 = vmul.f32 %v46, %v115
  %v258 = vmul.f32 %v47, %v147
  %v259 = vmul.f32 %v48, %v118
  %v260 = vmul.f32 %v49, %v150
  %v261 = vmul.f32 %v50, %v121
  %v262 = vmul.f32 %v51, %v153
  %v263 = vmul.f32 %v52, %v124
  %v264 = vmul.f32 %v53, %v156
  %v265 = vmul.f32 %v54, %v127
  %v266 = vmul.f32 %v55, %v159
  %v267 = vld [vmem:[%s4] sm:$0xff]
  %v268 = vld [vmem:[%s4 + $0x8] sm:$0xff]
  %v269 = vld [vmem:[%s4 + $0x10] sm:$0xff]
  %v270 = vld [vmem:[%s4 + $0x18] sm:$0xff]
  %v271 = vld [vmem:[%s4 + $0x20] sm:$0xff]
  %v272 = vld [vmem:[%s4 + $0x28] sm:$0xff]
  %v273 = vld [vmem:[%s4 + $0x30] sm:$0xff]
  %v274 = vld [vmem:[%s4 + $0x38] sm:$0xff]
  %v275 = vld [vmem:[%s4 + $0x40] sm:$0xff]
  %v276 = vld [vmem:[%s4 + $0x48] sm:$0xff]
  %v277 = vld [vmem:[%s4 + $0x50] sm:$0xff]
  %v278 = vld [vmem:[%s4 + $0x58] sm:$0xff]
  %v279 = vld [vmem:[%s4 + $0x60] sm:$0xff]
  %v280 = vld [vmem:[%s4 + $0x68] sm:$0xff]
  %v281 = vld [vmem:[%s4 + $0x70] sm:$0xff]
  %v282 = vld [vmem:[%s4 + $0x78] sm:$0xff]
  %v283 = vld [vmem:[%s4 + $0x80] sm:$0xff]
  %v284 = vld [vmem:[%s4 + $0x88] sm:$0xff]
  %v285 = vld [vmem:[%s4 + $0x90] sm:$0xff]
  %v286 = vld [vmem:[%s4 + $0x98] sm:$0xff]
  %v287 = vld [vmem:[%s4 + $0xa0] sm:$0xff]
  %v288 = vld [vmem:[%s4 + $0xa8] sm:$0xff]
  %v289 = vld [vmem:[%s4 + $0xb0] sm:$0xff]
  %v290 = vld [vmem:[%s4 + $0xb8] sm:$0xff]
  %v291 = vld [vmem:[%s4 + $0xc0] sm:$0xff]
  %v292 = vld [vmem:[%s4 + $0xc8] sm:$0xff]
  %v293 = vld [vmem:[%s4 + $0xd0] sm:$0xff]
  %v294 = vld [vmem:[%s4 + $0xd8] sm:$0xff]
  %v295 = vld [vmem:[%s4 + $0xe0] sm:$0xff]
  %v296 = vld [vmem:[%s4 + $0xe8] sm:$0xff]
  %v297 = vld [vmem:[%s4 + $0xf0] sm:$0xff]
  %v298 = vld [vmem:[%s4 + $0xf8] sm:$0xff]
  %299 = vmatpush.msra.mxu0 %v282
  %300 = vmatpush.msra.mxu0 %v281
  %301 = vmatpush.msra.mxu0 %v280
  %302 = vmatpush.msra.mxu0 %v279
  %303 = vmatpush.msra.mxu0 %v278
  %304 = vmatpush.msra.mxu0 %v277
  %305 = vmatpush.msra.mxu0 %v276
  %306 = vmatpush.msra.mxu0 %v275
  %307 = vmatpush.msra.mxu0 %v274
  %308 = vmatpush.msra.mxu0 %v273
  %309 = vmatpush.msra.mxu0 %v272
  %310 = vmatpush.msra.mxu0 %v271
  %311 = vmatpush.msra.mxu0 %v270
  %312 = vmatpush.msra.mxu0 %v269
  %313 = vmatpush.msra.mxu0 %v268
  %314 = vmatpush.msra.mxu0 %v267
  %315 = vmatmul.f32.gmra.mxu0 %v257
  %v316 = vpop.f32.mrf.mxu0
  %v317 = vadd.f32 %v56, %v316
  %318 = vmatmul.f32.gmra.mxu0 %v259
  %v319 = vpop.f32.mrf.mxu0
  %v320 = vadd.f32 %v57, %v319
  %321 = vmatmul.f32.gmra.mxu0 %v261
  %v322 = vpop.f32.mrf.mxu0
  %v323 = vadd.f32 %v58, %v322
  %324 = vmatmul.f32.gmra.mxu0 %v263
  %v325 = vpop.f32.mrf.mxu0
  %v326 = vadd.f32 %v59, %v325
  %327 = vmatmul.f32.gmra.mxu0 %v265
  %v328 = vpop.f32.mrf.mxu0
  %v329 = vadd.f32 %v60, %v328
  %330 = vdwg.mxu0
  %331 = vmatpush.msra.mxu0 %v298
  %332 = vmatpush.msra.mxu0 %v297
  %333 = vmatpush.msra.mxu0 %v296
  %334 = vmatpush.msra.mxu0 %v295
  %335 = vmatpush.msra.mxu0 %v294
  %336 = vmatpush.msra.mxu0 %v293
  %337 = vmatpush.msra.mxu0 %v292
  %338 = vmatpush.msra.mxu0 %v291
  %339 = vmatpush.msra.mxu0 %v290
  %340 = vmatpush.msra.mxu0 %v289
  %341 = vmatpush.msra.mxu0 %v288
  %342 = vmatpush.msra.mxu0 %v287
  %343 = vmatpush.msra.mxu0 %v286
  %344 = vmatpush.msra.mxu0 %v285
  %345 = vmatpush.msra.mxu0 %v284
  %346 = vmatpush.msra.mxu0 %v283
  %347 = vmatmul.f32.gmra.mxu0 %v258
  %v348 = vpop.f32.mrf.mxu0
  %v349 = vadd.f32 %v317, %v348
  %350 = vmatmul.f32.gmra.mxu0 %v260
  %v351 = vpop.f32.mrf.mxu0
  %v352 = vadd.f32 %v320, %v351
  %353 = vmatmul.f32.gmra.mxu0 %v262
  %v354 = vpop.f32.mrf.mxu0
  %v355 = vadd.f32 %v323, %v354
  %356 = vmatmul.f32.gmra.mxu0 %v264
  %v357 = vpop.f32.mrf.mxu0
  %v358 = vadd.f32 %v326, %v357
  %359 = vmatmul.f32.gmra.mxu0 %v266
  %v360 = vpop.f32.mrf.mxu0
  %v361 = vadd.f32 %v329, %v360
  %362 = vdwg.mxu0
  %vm363 = vcmask 64512
  %v364 = vsel %vm363, %v349, -inf
  %365 = vmax.xlane.f32.xlu0 %v364
  %v366 = vpop.xlane.xlu0 %365
  %v367 = vsel %vm363, %v352, -inf
  %368 = vmax.xlane.f32.xlu0 %v367
  %v369 = vpop.xlane.xlu0 %368
  %v370 = vsel %vm363, %v355, -inf
  %371 = vmax.xlane.f32.xlu0 %v370
  %v372 = vpop.xlane.xlu0 %371
  %v373 = vsel %vm363, %v358, -inf
  %374 = vmax.xlane.f32.xlu0 %v373
  %v375 = vpop.xlane.xlu0 %374
  %v376 = vsel %vm363, %v361, -inf
  %377 = vmax.xlane.f32.xlu0 %v376
  %v378 = vpop.xlane.xlu0 %377
  %v379 = vsub.f32 %v349, %v366
  %v380 = vsub.f32 %v352, %v369
  %v381 = vsub.f32 %v355, %v372
  %v382 = vsub.f32 %v358, %v375
  %v383 = vsub.f32 %v361, %v378
  %v384 = vmul.f32 %v379, 1.442695
  %v385 = vpow.pop %v384
  %v386 = vmul.f32 %v380, 1.442695
  %v387 = vpow.pop %v386
  %v388 = vmul.f32 %v381, 1.442695
  %v389 = vpow.pop %v388
  %v390 = vmul.f32 %v382, 1.442695
  %v391 = vpow.pop %v390
  %v392 = vmul.f32 %v383, 1.442695
  %v393 = vpow.pop %v392
  %v394 = vsel %vm363, %v385, 0.0
  %395 = vadd.xlane.f32.xlu0 %v394
  %v396 = vpop.xlane.xlu0 %395
  %v397 = vsel %vm363, %v387, 0.0
  %398 = vadd.xlane.f32.xlu0 %v397
  %v399 = vpop.xlane.xlu0 %398
  %v400 = vsel %vm363, %v389, 0.0
  %401 = vadd.xlane.f32.xlu0 %v400
  %v402 = vpop.xlane.xlu0 %401
  %v403 = vsel %vm363, %v391, 0.0
  %404 = vadd.xlane.f32.xlu0 %v403
  %v405 = vpop.xlane.xlu0 %404
  %v406 = vsel %vm363, %v393, 0.0
  %407 = vadd.xlane.f32.xlu0 %v406
  %v408 = vpop.xlane.xlu0 %407
  %v409 = vrcp.pop %v396
  %v410 = vmul.f32 %v396, %v409
  %v411 = vsub.f32 1.0, %v410
  %v412 = vmul.f32 %v409, %v411
  %v413 = vadd.f32 %v409, %v412
  %vm414 = vweird.f32 %v396
  %vm415 = vweird.f32 %v409
  %vm416 = vmor %vm414, %vm415
  %v417 = vsel %vm416, %v409, %v413
  %v418 = vand.u32 2147483647, %v396
  %vm419 = vcmp.eq.f32.partialorder %v418, 8.507059e+37
  %v420 = vand.u32 %v396, 2147483648
  %v421 = vor.u32 1.1754944e-38, %v420
  %v422 = vsel %vm419, %v421, %v417
  %v423 = vrcp.pop %v399
  %v424 = vmul.f32 %v399, %v423
  %v425 = vsub.f32 1.0, %v424
  %v426 = vmul.f32 %v423, %v425
  %v427 = vadd.f32 %v423, %v426
  %vm428 = vweird.f32 %v399
  %vm429 = vweird.f32 %v423
  %vm430 = vmor %vm428, %vm429
  %v431 = vsel %vm430, %v423, %v427
  %v432 = vand.u32 2147483647, %v399
  %vm433 = vcmp.eq.f32.partialorder %v432, 8.507059e+37
  %v434 = vand.u32 %v399, 2147483648
  %v435 = vor.u32 1.1754944e-38, %v434
  %v436 = vsel %vm433, %v435, %v431
  %v437 = vrcp.pop %v402
  %v438 = vmul.f32 %v402, %v437
  %v439 = vsub.f32 1.0, %v438
  %v440 = vmul.f32 %v437, %v439
  %v441 = vadd.f32 %v437, %v440
  %vm442 = vweird.f32 %v402
  %vm443 = vweird.f32 %v437
  %vm444 = vmor %vm442, %vm443
  %v445 = vsel %vm444, %v437, %v441
  %v446 = vand.u32 2147483647, %v402
  %vm447 = vcmp.eq.f32.partialorder %v446, 8.507059e+37
  %v448 = vand.u32 %v402, 2147483648
  %v449 = vor.u32 1.1754944e-38, %v448
  %v450 = vsel %vm447, %v449, %v445
  %v451 = vrcp.pop %v405
  %v452 = vmul.f32 %v405, %v451
  %v453 = vsub.f32 1.0, %v452
  %v454 = vmul.f32 %v451, %v453
  %v455 = vadd.f32 %v451, %v454
  %vm456 = vweird.f32 %v405
  %vm457 = vweird.f32 %v451
  %vm458 = vmor %vm456, %vm457
  %v459 = vsel %vm458, %v451, %v455
  %v460 = vand.u32 2147483647, %v405
  %vm461 = vcmp.eq.f32.partialorder %v460, 8.507059e+37
  %v462 = vand.u32 %v405, 2147483648
  %v463 = vor.u32 1.1754944e-38, %v462
  %v464 = vsel %vm461, %v463, %v459
  %v465 = vrcp.pop %v408
  %v466 = vmul.f32 %v408, %v465
  %v467 = vsub.f32 1.0, %v466
  %v468 = vmul.f32 %v465, %v467
  %v469 = vadd.f32 %v465, %v468
  %vm470 = vweird.f32 %v408
  %vm471 = vweird.f32 %v465
  %vm472 = vmor %vm470, %vm471
  %v473 = vsel %vm472, %v465, %v469
  %v474 = vand.u32 2147483647, %v408
  %vm475 = vcmp.eq.f32.partialorder %v474, 8.507059e+37
  %v476 = vand.u32 %v408, 2147483648
  %v477 = vor.u32 1.1754944e-38, %v476
  %v478 = vsel %vm475, %v477, %v473
  %v479 = vmul.f32 %v385, %v422
  %v480 = vmul.f32 %v387, %v436
  %v481 = vmul.f32 %v389, %v450
  %v482 = vmul.f32 %v391, %v464
  %v483 = vmul.f32 %v393, %v478
  %v484 = vld [vmem:[%s5] sm:$0xff]
  %v485 = vld [vmem:[%s5 + $0x8] sm:$0xff]
  %v487 = vsel %vm363, %v479, 0
  %v490 = vsel %vm363, %v480, 0
  %v493 = vsel %vm363, %v481, 0
  %v496 = vsel %vm363, %v482, 0
  %v499 = vsel %vm363, %v483, 0
  %501 = vmatpush.msra.mxu0 0.0
  %502 = vmatpush.msra.mxu0 0.0
  %503 = vmatpush.msra.mxu0 0.0
  %504 = vmatpush.msra.mxu0 0.0
  %505 = vmatpush.msra.mxu0 0.0
  %506 = vmatpush.msra.mxu0 0.0
  %507 = vmatpush.msra.mxu0 0.0
  %508 = vmatpush.msra.mxu0 0.0
  %509 = vmatpush.msra.mxu0 0.0
  %510 = vmatpush.msra.mxu0 0.0
  %511 = vmatpush.msra.mxu0 0.0
  %512 = vmatpush.msra.mxu0 0.0
  %513 = vmatpush.msra.mxu0 0.0
  %514 = vmatpush.msra.mxu0 0.0
  %515 = vmatpush.msra.mxu0 0.0
  %516 = vmatpush.msra.mxu0 %v484
  %517 = vmatmul.f32.gmra.mxu0 %v487
  %v518 = vpop.f32.mrf.mxu0
  %v519 = vadd.f32 0.0, %v518
  %520 = vmatmul.f32.gmra.mxu0 %v490
  %v521 = vpop.f32.mrf.mxu0
  %v522 = vadd.f32 0.0, %v521
  %523 = vmatmul.f32.gmra.mxu0 %v493
  %v524 = vpop.f32.mrf.mxu0
  %v525 = vadd.f32 0.0, %v524
  %526 = vmatmul.f32.gmra.mxu0 %v496
  %v527 = vpop.f32.mrf.mxu0
  %v528 = vadd.f32 0.0, %v527
  %529 = vmatmul.f32.gmra.mxu0 %v499
  %v530 = vpop.f32.mrf.mxu0
  %v531 = vadd.f32 0.0, %v530
  %532 = vdwg.mxu0
  %533 = vmatpush.msra.mxu0 0.0
  %534 = vmatpush.msra.mxu0 0.0
  %535 = vmatpush.msra.mxu0 0.0
  %536 = vmatpush.msra.mxu0 0.0
  %537 = vmatpush.msra.mxu0 0.0
  %538 = vmatpush.msra.mxu0 0.0
  %539 = vmatpush.msra.mxu0 0.0
  %540 = vmatpush.msra.mxu0 0.0
  %541 = vmatpush.msra.mxu0 0.0
  %542 = vmatpush.msra.mxu0 0.0
  %543 = vmatpush.msra.mxu0 0.0
  %544 = vmatpush.msra.mxu0 0.0
  %545 = vmatpush.msra.mxu0 0.0
  %546 = vmatpush.msra.mxu0 0.0
  %547 = vmatpush.msra.mxu0 0.0
  %548 = vmatpush.msra.mxu0 %v485
  %549 = vmatmul.f32.gmra.mxu0 %v487
  %v550 = vpop.f32.mrf.mxu0
  %v551 = vadd.f32 0.0, %v550
  %552 = vmatmul.f32.gmra.mxu0 %v490
  %v553 = vpop.f32.mrf.mxu0
  %v554 = vadd.f32 0.0, %v553
  %555 = vmatmul.f32.gmra.mxu0 %v493
  %v556 = vpop.f32.mrf.mxu0
  %v557 = vadd.f32 0.0, %v556
  %558 = vmatmul.f32.gmra.mxu0 %v496
  %v559 = vpop.f32.mrf.mxu0
  %v560 = vadd.f32 0.0, %v559
  %561 = vmatmul.f32.gmra.mxu0 %v499
  %v562 = vpop.f32.mrf.mxu0
  %v563 = vadd.f32 0.0, %v562
  %564 = vdwg.mxu0
  %v565 = vmul.f32 %v519, %v46
  %v566 = vmul.f32 %v551, %v47
  %v567 = vmul.f32 %v522, %v48
  %v568 = vmul.f32 %v554, %v49
  %v569 = vmul.f32 %v525, %v50
  %v570 = vmul.f32 %v557, %v51
  %v571 = vmul.f32 %v528, %v52
  %v572 = vmul.f32 %v560, %v53
  %v573 = vmul.f32 %v531, %v54
  %v574 = vmul.f32 %v563, %v55
  %v575 = vld [vmem:[%s6] sm:$0xff]
  %v576 = vld [vmem:[%s6 + $0x8] sm:$0xff]
  %v577 = vld [vmem:[%s6 + $0x10] sm:$0xff]
  %v578 = vld [vmem:[%s6 + $0x18] sm:$0xff]
  %v579 = vld [vmem:[%s6 + $0x20] sm:$0xff]
  %v580 = vld [vmem:[%s6 + $0x28] sm:$0xff]
  %v581 = vld [vmem:[%s6 + $0x30] sm:$0xff]
  %v582 = vld [vmem:[%s6 + $0x38] sm:$0xff]
  %v583 = vld [vmem:[%s6 + $0x40] sm:$0xff]
  %v584 = vld [vmem:[%s6 + $0x48] sm:$0xff]
  %v585 = vld [vmem:[%s6 + $0x50] sm:$0xff]
  %v586 = vld [vmem:[%s6 + $0x58] sm:$0xff]
  %v587 = vld [vmem:[%s6 + $0x60] sm:$0xff]
  %v588 = vld [vmem:[%s6 + $0x68] sm:$0xff]
  %v589 = vld [vmem:[%s6 + $0x70] sm:$0xff]
  %v590 = vld [vmem:[%s6 + $0x78] sm:$0xff]
  %v591 = vld [vmem:[%s6 + $0x80] sm:$0xff]
  %v592 = vld [vmem:[%s6 + $0x88] sm:$0xff]
  %v593 = vld [vmem:[%s6 + $0x90] sm:$0xff]
  %v594 = vld [vmem:[%s6 + $0x98] sm:$0xff]
  %v595 = vld [vmem:[%s6 + $0xa0] sm:$0xff]
  %v596 = vld [vmem:[%s6 + $0xa8] sm:$0xff]
  %v597 = vld [vmem:[%s6 + $0xb0] sm:$0xff]
  %v598 = vld [vmem:[%s6 + $0xb8] sm:$0xff]
  %v599 = vld [vmem:[%s6 + $0xc0] sm:$0xff]
  %v600 = vld [vmem:[%s6 + $0xc8] sm:$0xff]
  %v601 = vld [vmem:[%s6 + $0xd0] sm:$0xff]
  %v602 = vld [vmem:[%s6 + $0xd8] sm:$0xff]
  %v603 = vld [vmem:[%s6 + $0xe0] sm:$0xff]
  %v604 = vld [vmem:[%s6 + $0xe8] sm:$0xff]
  %v605 = vld [vmem:[%s6 + $0xf0] sm:$0xff]
  %v606 = vld [vmem:[%s6 + $0xf8] sm:$0xff]
  %v607 = vmul.f32 %v46, %v179
  %v608 = vmul.f32 %v47, %v211
  %v609 = vmul.f32 %v48, %v182
  %v610 = vmul.f32 %v49, %v214
  %v611 = vmul.f32 %v50, %v185
  %v612 = vmul.f32 %v51, %v217
  %v613 = vmul.f32 %v52, %v188
  %v614 = vmul.f32 %v53, %v220
  %v615 = vmul.f32 %v54, %v191
  %v616 = vmul.f32 %v55, %v223
  %617 = vmatpush.msra.mxu0 %v282
  %618 = vmatpush.msra.mxu0 %v281
  %619 = vmatpush.msra.mxu0 %v280
  %620 = vmatpush.msra.mxu0 %v279
  %621 = vmatpush.msra.mxu0 %v278
  %622 = vmatpush.msra.mxu0 %v277
  %623 = vmatpush.msra.mxu0 %v276
  %624 = vmatpush.msra.mxu0 %v275
  %625 = vmatpush.msra.mxu0 %v274
  %626 = vmatpush.msra.mxu0 %v273
  %627 = vmatpush.msra.mxu0 %v272
  %628 = vmatpush.msra.mxu0 %v271
  %629 = vmatpush.msra.mxu0 %v270
  %630 = vmatpush.msra.mxu0 %v269
  %631 = vmatpush.msra.mxu0 %v268
  %632 = vmatpush.msra.mxu0 %v267
  %633 = vmatmul.f32.gmra.mxu0 %v607
  %v634 = vpop.f32.mrf.mxu0
  %v635 = vadd.f32 %v56, %v634
  %636 = vmatmul.f32.gmra.mxu0 %v609
  %v637 = vpop.f32.mrf.mxu0
  %v638 = vadd.f32 %v57, %v637
  %639 = vmatmul.f32.gmra.mxu0 %v611
  %v640 = vpop.f32.mrf.mxu0
  %v641 = vadd.f32 %v58, %v640
  %642 = vmatmul.f32.gmra.mxu0 %v613
  %v643 = vpop.f32.mrf.mxu0
  %v644 = vadd.f32 %v59, %v643
  %645 = vmatmul.f32.gmra.mxu0 %v615
  %v646 = vpop.f32.mrf.mxu0
  %v647 = vadd.f32 %v60, %v646
  %648 = vdwg.mxu0
  %649 = vmatpush.msra.mxu0 %v298
  %650 = vmatpush.msra.mxu0 %v297
  %651 = vmatpush.msra.mxu0 %v296
  %652 = vmatpush.msra.mxu0 %v295
  %653 = vmatpush.msra.mxu0 %v294
  %654 = vmatpush.msra.mxu0 %v293
  %655 = vmatpush.msra.mxu0 %v292
  %656 = vmatpush.msra.mxu0 %v291
  %657 = vmatpush.msra.mxu0 %v290
  %658 = vmatpush.msra.mxu0 %v289
  %659 = vmatpush.msra.mxu0 %v288
  %660 = vmatpush.msra.mxu0 %v287
  %661 = vmatpush.msra.mxu0 %v286
  %662 = vmatpush.msra.mxu0 %v285
  %663 = vmatpush.msra.mxu0 %v284
  %664 = vmatpush.msra.mxu0 %v283
  %665 = vmatmul.f32.gmra.mxu0 %v608
  %v666 = vpop.f32.mrf.mxu0
  %v667 = vadd.f32 %v635, %v666
  %668 = vmatmul.f32.gmra.mxu0 %v610
  %v669 = vpop.f32.mrf.mxu0
  %v670 = vadd.f32 %v638, %v669
  %671 = vmatmul.f32.gmra.mxu0 %v612
  %v672 = vpop.f32.mrf.mxu0
  %v673 = vadd.f32 %v641, %v672
  %674 = vmatmul.f32.gmra.mxu0 %v614
  %v675 = vpop.f32.mrf.mxu0
  %v676 = vadd.f32 %v644, %v675
  %677 = vmatmul.f32.gmra.mxu0 %v616
  %v678 = vpop.f32.mrf.mxu0
  %v679 = vadd.f32 %v647, %v678
  %680 = vdwg.mxu0
  %v681 = vsel %vm363, %v667, -inf
  %682 = vmax.xlane.f32.xlu0 %v681
  %v683 = vpop.xlane.xlu0 %682
  %v684 = vsel %vm363, %v670, -inf
  %685 = vmax.xlane.f32.xlu0 %v684
  %v686 = vpop.xlane.xlu0 %685
  %v687 = vsel %vm363, %v673, -inf
  %688 = vmax.xlane.f32.xlu0 %v687
  %v689 = vpop.xlane.xlu0 %688
  %v690 = vsel %vm363, %v676, -inf
  %691 = vmax.xlane.f32.xlu0 %v690
  %v692 = vpop.xlane.xlu0 %691
  %v693 = vsel %vm363, %v679, -inf
  %694 = vmax.xlane.f32.xlu0 %v693
  %v695 = vpop.xlane.xlu0 %694
  %v696 = vsub.f32 %v667, %v683
  %v697 = vsub.f32 %v670, %v686
  %v698 = vsub.f32 %v673, %v689
  %v699 = vsub.f32 %v676, %v692
  %v700 = vsub.f32 %v679, %v695
  %v701 = vmul.f32 %v696, 1.442695
  %v702 = vpow.pop %v701
  %v703 = vmul.f32 %v697, 1.442695
  %v704 = vpow.pop %v703
  %v705 = vmul.f32 %v698, 1.442695
  %v706 = vpow.pop %v705
  %v707 = vmul.f32 %v699, 1.442695
  %v708 = vpow.pop %v707
  %v709 = vmul.f32 %v700, 1.442695
  %v710 = vpow.pop %v709
  %v711 = vsel %vm363, %v702, 0.0
  %712 = vadd.xlane.f32.xlu0 %v711
  %v713 = vpop.xlane.xlu0 %712
  %v714 = vsel %vm363, %v704, 0.0
  %715 = vadd.xlane.f32.xlu0 %v714
  %v716 = vpop.xlane.xlu0 %715
  %v717 = vsel %vm363, %v706, 0.0
  %718 = vadd.xlane.f32.xlu0 %v717
  %v719 = vpop.xlane.xlu0 %718
  %v720 = vsel %vm363, %v708, 0.0
  %721 = vadd.xlane.f32.xlu0 %v720
  %v722 = vpop.xlane.xlu0 %721
  %v723 = vsel %vm363, %v710, 0.0
  %724 = vadd.xlane.f32.xlu0 %v723
  %v725 = vpop.xlane.xlu0 %724
  %v726 = vrcp.pop %v713
  %v727 = vmul.f32 %v713, %v726
  %v728 = vsub.f32 1.0, %v727
  %v729 = vmul.f32 %v726, %v728
  %v730 = vadd.f32 %v726, %v729
  %vm731 = vweird.f32 %v713
  %vm732 = vweird.f32 %v726
  %vm733 = vmor %vm731, %vm732
  %v734 = vsel %vm733, %v726, %v730
  %v735 = vand.u32 2147483647, %v713
  %vm736 = vcmp.eq.f32.partialorder %v735, 8.507059e+37
  %v737 = vand.u32 %v713, 2147483648
  %v738 = vor.u32 1.1754944e-38, %v737
  %v739 = vsel %vm736, %v738, %v734
  %v740 = vrcp.pop %v716
  %v741 = vmul.f32 %v716, %v740
  %v742 = vsub.f32 1.0, %v741
  %v743 = vmul.f32 %v740, %v742
  %v744 = vadd.f32 %v740, %v743
  %vm745 = vweird.f32 %v716
  %vm746 = vweird.f32 %v740
  %vm747 = vmor %vm745, %vm746
  %v748 = vsel %vm747, %v740, %v744
  %v749 = vand.u32 2147483647, %v716
  %vm750 = vcmp.eq.f32.partialorder %v749, 8.507059e+37
  %v751 = vand.u32 %v716, 2147483648
  %v752 = vor.u32 1.1754944e-38, %v751
  %v753 = vsel %vm750, %v752, %v748
  %v754 = vrcp.pop %v719
  %v755 = vmul.f32 %v719, %v754
  %v756 = vsub.f32 1.0, %v755
  %v757 = vmul.f32 %v754, %v756
  %v758 = vadd.f32 %v754, %v757
  %vm759 = vweird.f32 %v719
  %vm760 = vweird.f32 %v754
  %vm761 = vmor %vm759, %vm760
  %v762 = vsel %vm761, %v754, %v758
  %v763 = vand.u32 2147483647, %v719
  %vm764 = vcmp.eq.f32.partialorder %v763, 8.507059e+37
  %v765 = vand.u32 %v719, 2147483648
  %v766 = vor.u32 1.1754944e-38, %v765
  %v767 = vsel %vm764, %v766, %v762
  %v768 = vrcp.pop %v722
  %v769 = vmul.f32 %v722, %v768
  %v770 = vsub.f32 1.0, %v769
  %v771 = vmul.f32 %v768, %v770
  %v772 = vadd.f32 %v768, %v771
  %vm773 = vweird.f32 %v722
  %vm774 = vweird.f32 %v768
  %vm775 = vmor %vm773, %vm774
  %v776 = vsel %vm775, %v768, %v772
  %v777 = vand.u32 2147483647, %v722
  %vm778 = vcmp.eq.f32.partialorder %v777, 8.507059e+37
  %v779 = vand.u32 %v722, 2147483648
  %v780 = vor.u32 1.1754944e-38, %v779
  %v781 = vsel %vm778, %v780, %v776
  %v782 = vrcp.pop %v725
  %v783 = vmul.f32 %v725, %v782
  %v784 = vsub.f32 1.0, %v783
  %v785 = vmul.f32 %v782, %v784
  %v786 = vadd.f32 %v782, %v785
  %vm787 = vweird.f32 %v725
  %vm788 = vweird.f32 %v782
  %vm789 = vmor %vm787, %vm788
  %v790 = vsel %vm789, %v782, %v786
  %v791 = vand.u32 2147483647, %v725
  %vm792 = vcmp.eq.f32.partialorder %v791, 8.507059e+37
  %v793 = vand.u32 %v725, 2147483648
  %v794 = vor.u32 1.1754944e-38, %v793
  %v795 = vsel %vm792, %v794, %v790
  %v796 = vmul.f32 %v702, %v739
  %v797 = vmul.f32 %v704, %v753
  %v798 = vmul.f32 %v706, %v767
  %v799 = vmul.f32 %v708, %v781
  %v800 = vmul.f32 %v710, %v795
  %v802 = vsel %vm363, %v796, 0
  %v805 = vsel %vm363, %v797, 0
  %v808 = vsel %vm363, %v798, 0
  %v811 = vsel %vm363, %v799, 0
  %v814 = vsel %vm363, %v800, 0
  %816 = vmatpush.msra.mxu0 0.0
  %817 = vmatpush.msra.mxu0 0.0
  %818 = vmatpush.msra.mxu0 0.0
  %819 = vmatpush.msra.mxu0 0.0
  %820 = vmatpush.msra.mxu0 0.0
  %821 = vmatpush.msra.mxu0 0.0
  %822 = vmatpush.msra.mxu0 0.0
  %823 = vmatpush.msra.mxu0 0.0
  %824 = vmatpush.msra.mxu0 0.0
  %825 = vmatpush.msra.mxu0 0.0
  %826 = vmatpush.msra.mxu0 0.0
  %827 = vmatpush.msra.mxu0 0.0
  %828 = vmatpush.msra.mxu0 0.0
  %829 = vmatpush.msra.mxu0 0.0
  %830 = vmatpush.msra.mxu0 0.0
  %831 = vmatpush.msra.mxu0 %v484
  %832 = vmatmul.f32.gmra.mxu0 %v802
  %v833 = vpop.f32.mrf.mxu0
  %v834 = vadd.f32 0.0, %v833
  %835 = vmatmul.f32.gmra.mxu0 %v805
  %v836 = vpop.f32.mrf.mxu0
  %v837 = vadd.f32 0.0, %v836
  %838 = vmatmul.f32.gmra.mxu0 %v808
  %v839 = vpop.f32.mrf.mxu0
  %v840 = vadd.f32 0.0, %v839
  %841 = vmatmul.f32.gmra.mxu0 %v811
  %v842 = vpop.f32.mrf.mxu0
  %v843 = vadd.f32 0.0, %v842
  %844 = vmatmul.f32.gmra.mxu0 %v814
  %v845 = vpop.f32.mrf.mxu0
  %v846 = vadd.f32 0.0, %v845
  %847 = vdwg.mxu0
  %848 = vmatpush.msra.mxu0 0.0
  %849 = vmatpush.msra.mxu0 0.0
  %850 = vmatpush.msra.mxu0 0.0
  %851 = vmatpush.msra.mxu0 0.0
  %852 = vmatpush.msra.mxu0 0.0
  %853 = vmatpush.msra.mxu0 0.0
  %854 = vmatpush.msra.mxu0 0.0
  %855 = vmatpush.msra.mxu0 0.0
  %856 = vmatpush.msra.mxu0 0.0
  %857 = vmatpush.msra.mxu0 0.0
  %858 = vmatpush.msra.mxu0 0.0
  %859 = vmatpush.msra.mxu0 0.0
  %860 = vmatpush.msra.mxu0 0.0
  %861 = vmatpush.msra.mxu0 0.0
  %862 = vmatpush.msra.mxu0 0.0
  %863 = vmatpush.msra.mxu0 %v485
  %864 = vmatmul.f32.gmra.mxu0 %v802
  %v865 = vpop.f32.mrf.mxu0
  %v866 = vadd.f32 0.0, %v865
  %867 = vmatmul.f32.gmra.mxu0 %v805
  %v868 = vpop.f32.mrf.mxu0
  %v869 = vadd.f32 0.0, %v868
  %870 = vmatmul.f32.gmra.mxu0 %v808
  %v871 = vpop.f32.mrf.mxu0
  %v872 = vadd.f32 0.0, %v871
  %873 = vmatmul.f32.gmra.mxu0 %v811
  %v874 = vpop.f32.mrf.mxu0
  %v875 = vadd.f32 0.0, %v874
  %876 = vmatmul.f32.gmra.mxu0 %v814
  %v877 = vpop.f32.mrf.mxu0
  %v878 = vadd.f32 0.0, %v877
  %879 = vdwg.mxu0
  %v880 = vmul.f32 %v834, %v46
  %v881 = vmul.f32 %v866, %v47
  %v882 = vmul.f32 %v837, %v48
  %v883 = vmul.f32 %v869, %v49
  %v884 = vmul.f32 %v840, %v50
  %v885 = vmul.f32 %v872, %v51
  %v886 = vmul.f32 %v843, %v52
  %v887 = vmul.f32 %v875, %v53
  %v888 = vmul.f32 %v846, %v54
  %v889 = vmul.f32 %v878, %v55
  %v890 = vld [vmem:[%s6 + $0x100] sm:$0xff]
  %v891 = vld [vmem:[%s6 + $0x108] sm:$0xff]
  %v892 = vld [vmem:[%s6 + $0x110] sm:$0xff]
  %v893 = vld [vmem:[%s6 + $0x118] sm:$0xff]
  %v894 = vld [vmem:[%s6 + $0x120] sm:$0xff]
  %v895 = vld [vmem:[%s6 + $0x128] sm:$0xff]
  %v896 = vld [vmem:[%s6 + $0x130] sm:$0xff]
  %v897 = vld [vmem:[%s6 + $0x138] sm:$0xff]
  %v898 = vld [vmem:[%s6 + $0x140] sm:$0xff]
  %v899 = vld [vmem:[%s6 + $0x148] sm:$0xff]
  %v900 = vld [vmem:[%s6 + $0x150] sm:$0xff]
  %v901 = vld [vmem:[%s6 + $0x158] sm:$0xff]
  %v902 = vld [vmem:[%s6 + $0x160] sm:$0xff]
  %v903 = vld [vmem:[%s6 + $0x168] sm:$0xff]
  %v904 = vld [vmem:[%s6 + $0x170] sm:$0xff]
  %v905 = vld [vmem:[%s6 + $0x178] sm:$0xff]
  %v906 = vld [vmem:[%s6 + $0x180] sm:$0xff]
  %v907 = vld [vmem:[%s6 + $0x188] sm:$0xff]
  %v908 = vld [vmem:[%s6 + $0x190] sm:$0xff]
  %v909 = vld [vmem:[%s6 + $0x198] sm:$0xff]
  %v910 = vld [vmem:[%s6 + $0x1a0] sm:$0xff]
  %v911 = vld [vmem:[%s6 + $0x1a8] sm:$0xff]
  %v912 = vld [vmem:[%s6 + $0x1b0] sm:$0xff]
  %v913 = vld [vmem:[%s6 + $0x1b8] sm:$0xff]
  %v914 = vld [vmem:[%s6 + $0x1c0] sm:$0xff]
  %v915 = vld [vmem:[%s6 + $0x1c8] sm:$0xff]
  %v916 = vld [vmem:[%s6 + $0x1d0] sm:$0xff]
  %v917 = vld [vmem:[%s6 + $0x1d8] sm:$0xff]
  %v918 = vld [vmem:[%s6 + $0x1e0] sm:$0xff]
  %v919 = vld [vmem:[%s6 + $0x1e8] sm:$0xff]
  %v920 = vld [vmem:[%s6 + $0x1f0] sm:$0xff]
  %v921 = vld [vmem:[%s6 + $0x1f8] sm:$0xff]
  %922 = vmatpush.msra.mxu0 %v905
  %923 = vmatpush.msra.mxu0 %v904
  %924 = vmatpush.msra.mxu0 %v903
  %925 = vmatpush.msra.mxu0 %v902
  %926 = vmatpush.msra.mxu0 %v901
  %927 = vmatpush.msra.mxu0 %v900
  %928 = vmatpush.msra.mxu0 %v899
  %929 = vmatpush.msra.mxu0 %v898
  %930 = vmatpush.msra.mxu0 %v897
  %931 = vmatpush.msra.mxu0 %v896
  %932 = vmatpush.msra.mxu0 %v895
  %933 = vmatpush.msra.mxu0 %v894
  %934 = vmatpush.msra.mxu0 %v893
  %935 = vmatpush.msra.mxu0 %v892
  %936 = vmatpush.msra.mxu0 %v891
  %937 = vmatpush.msra.mxu0 %v890
  %938 = vmatmul.f32.gmra.mxu0 %v880
  %v939 = vpop.f32.mrf.mxu0
  %v940 = vadd.f32 0.0, %v939
  %941 = vmatmul.f32.gmra.mxu0 %v882
  %v942 = vpop.f32.mrf.mxu0
  %v943 = vadd.f32 0.0, %v942
  %944 = vmatmul.f32.gmra.mxu0 %v884
  %v945 = vpop.f32.mrf.mxu0
  %v946 = vadd.f32 0.0, %v945
  %947 = vmatmul.f32.gmra.mxu0 %v886
  %v948 = vpop.f32.mrf.mxu0
  %v949 = vadd.f32 0.0, %v948
  %950 = vmatmul.f32.gmra.mxu0 %v888
  %v951 = vpop.f32.mrf.mxu0
  %v952 = vadd.f32 0.0, %v951
  %953 = vdwg.mxu0
  %954 = vmatpush.msra.mxu0 %v921
  %955 = vmatpush.msra.mxu0 %v920
  %956 = vmatpush.msra.mxu0 %v919
  %957 = vmatpush.msra.mxu0 %v918
  %958 = vmatpush.msra.mxu0 %v917
  %959 = vmatpush.msra.mxu0 %v916
  %960 = vmatpush.msra.mxu0 %v915
  %961 = vmatpush.msra.mxu0 %v914
  %962 = vmatpush.msra.mxu0 %v913
  %963 = vmatpush.msra.mxu0 %v912
  %964 = vmatpush.msra.mxu0 %v911
  %965 = vmatpush.msra.mxu0 %v910
  %966 = vmatpush.msra.mxu0 %v909
  %967 = vmatpush.msra.mxu0 %v908
  %968 = vmatpush.msra.mxu0 %v907
  %969 = vmatpush.msra.mxu0 %v906
  %970 = vmatmul.f32.gmra.mxu0 %v881
  %v971 = vpop.f32.mrf.mxu0
  %v972 = vadd.f32 %v940, %v971
  %973 = vmatmul.f32.gmra.mxu0 %v883
  %v974 = vpop.f32.mrf.mxu0
  %v975 = vadd.f32 %v943, %v974
  %976 = vmatmul.f32.gmra.mxu0 %v885
  %v977 = vpop.f32.mrf.mxu0
  %v978 = vadd.f32 %v946, %v977
  %979 = vmatmul.f32.gmra.mxu0 %v887
  %v980 = vpop.f32.mrf.mxu0
  %v981 = vadd.f32 %v949, %v980
  %982 = vmatmul.f32.gmra.mxu0 %v889
  %v983 = vpop.f32.mrf.mxu0
  %v984 = vadd.f32 %v952, %v983
  %985 = vdwg.mxu0
  %986 = vmatpush.msra.mxu0 %v590
  %987 = vmatpush.msra.mxu0 %v589
  %988 = vmatpush.msra.mxu0 %v588
  %989 = vmatpush.msra.mxu0 %v587
  %990 = vmatpush.msra.mxu0 %v586
  %991 = vmatpush.msra.mxu0 %v585
  %992 = vmatpush.msra.mxu0 %v584
  %993 = vmatpush.msra.mxu0 %v583
  %994 = vmatpush.msra.mxu0 %v582
  %995 = vmatpush.msra.mxu0 %v581
  %996 = vmatpush.msra.mxu0 %v580
  %997 = vmatpush.msra.mxu0 %v579
  %998 = vmatpush.msra.mxu0 %v578
  %999 = vmatpush.msra.mxu0 %v577
  %1000 = vmatpush.msra.mxu0 %v576
  %1001 = vmatpush.msra.mxu0 %v575
  %1002 = vmatmul.f32.gmra.mxu0 %v565
  %v1003 = vpop.f32.mrf.mxu0
  %v1004 = vadd.f32 %v972, %v1003
  %1005 = vmatmul.f32.gmra.mxu0 %v567
  %v1006 = vpop.f32.mrf.mxu0
  %v1007 = vadd.f32 %v975, %v1006
  %1008 = vmatmul.f32.gmra.mxu0 %v569
  %v1009 = vpop.f32.mrf.mxu0
  %v1010 = vadd.f32 %v978, %v1009
  %1011 = vmatmul.f32.gmra.mxu0 %v571
  %v1012 = vpop.f32.mrf.mxu0
  %v1013 = vadd.f32 %v981, %v1012
  %1014 = vmatmul.f32.gmra.mxu0 %v573
  %v1015 = vpop.f32.mrf.mxu0
  %v1016 = vadd.f32 %v984, %v1015
  %1017 = vdwg.mxu0
  %1018 = vmatpush.msra.mxu0 %v606
  %1019 = vmatpush.msra.mxu0 %v605
  %1020 = vmatpush.msra.mxu0 %v604
  %1021 = vmatpush.msra.mxu0 %v603
  %1022 = vmatpush.msra.mxu0 %v602
  %1023 = vmatpush.msra.mxu0 %v601
  %1024 = vmatpush.msra.mxu0 %v600
  %1025 = vmatpush.msra.mxu0 %v599
  %1026 = vmatpush.msra.mxu0 %v598
  %1027 = vmatpush.msra.mxu0 %v597
  %1028 = vmatpush.msra.mxu0 %v596
  %1029 = vmatpush.msra.mxu0 %v595
  %1030 = vmatpush.msra.mxu0 %v594
  %1031 = vmatpush.msra.mxu0 %v593
  %1032 = vmatpush.msra.mxu0 %v592
  %1033 = vmatpush.msra.mxu0 %v591
  %1034 = vmatmul.f32.gmra.mxu0 %v566
  %v1035 = vpop.f32.mrf.mxu0
  %v1036 = vadd.f32 %v1004, %v1035
  %1037 = vmatmul.f32.gmra.mxu0 %v568
  %v1038 = vpop.f32.mrf.mxu0
  %v1039 = vadd.f32 %v1007, %v1038
  %1040 = vmatmul.f32.gmra.mxu0 %v570
  %v1041 = vpop.f32.mrf.mxu0
  %v1042 = vadd.f32 %v1010, %v1041
  %1043 = vmatmul.f32.gmra.mxu0 %v572
  %v1044 = vpop.f32.mrf.mxu0
  %v1045 = vadd.f32 %v1013, %v1044
  %1046 = vmatmul.f32.gmra.mxu0 %v574
  %v1047 = vpop.f32.mrf.mxu0
  %v1048 = vadd.f32 %v1016, %v1047
  %1049 = vdwg.mxu0
  %v1050 = vld [vmem:[%s7] sm:$0x1]
  %v1052 = vperm.slane %v1050, 0
  %v1054 = vadd.f32 %v1036, %v1052
  %v1055 = vadd.f32 %v1039, %v1052
  %v1056 = vadd.f32 %v1042, %v1052
  %v1057 = vadd.f32 %v1045, %v1052
  %v1058 = vadd.f32 %v1048, %v1052
  %v1059 = vadd.f32 %v1054, %v41
  %v1060 = vadd.f32 %v1055, %v42
  %v1061 = vadd.f32 %v1056, %v43
  %v1062 = vadd.f32 %v1057, %v44
  %v1063 = vadd.f32 %v1058, %v45
  %v1064 = vsel %vm81, %v1059, 0.0
  %1065 = vadd.xlane.f32.xlu0 %v1064
  %v1066 = vpop.xlane.xlu0 %1065
  %v1067 = vsel %vm81, %v1060, 0.0
  %1068 = vadd.xlane.f32.xlu0 %v1067
  %v1069 = vpop.xlane.xlu0 %1068
  %v1070 = vsel %vm81, %v1061, 0.0
  %1071 = vadd.xlane.f32.xlu0 %v1070
  %v1072 = vpop.xlane.xlu0 %1071
  %v1073 = vsel %vm81, %v1062, 0.0
  %1074 = vadd.xlane.f32.xlu0 %v1073
  %v1075 = vpop.xlane.xlu0 %1074
  %v1076 = vsel %vm81, %v1063, 0.0
  %1077 = vadd.xlane.f32.xlu0 %v1076
  %v1078 = vpop.xlane.xlu0 %1077
  %v1079 = vrcp.pop 32.0
  %v1080 = vmul.f32 32.0, %v1079
  %v1081 = vsub.f32 1.0, %v1080
  %v1082 = vmul.f32 %v1079, %v1081
  %v1083 = vadd.f32 %v1079, %v1082
  %vm1084 = vweird.f32 %v1079
  %v1085 = vsel %vm1084, %v1079, %v1083
  %v1086 = vmul.f32 %v1066, %v1085
  %v1087 = vmul.f32 %v1069, %v1085
  %v1088 = vmul.f32 %v1072, %v1085
  %v1089 = vmul.f32 %v1075, %v1085
  %v1090 = vmul.f32 %v1078, %v1085
  %v1091 = vmul.f32 %v1059, %v1059
  %v1092 = vmul.f32 %v1060, %v1060
  %v1093 = vmul.f32 %v1061, %v1061
  %v1094 = vmul.f32 %v1062, %v1062
  %v1095 = vmul.f32 %v1063, %v1063
  %v1096 = vsel %vm81, %v1091, 0.0
  %1097 = vadd.xlane.f32.xlu0 %v1096
  %v1098 = vpop.xlane.xlu0 %1097
  %v1099 = vsel %vm81, %v1092, 0.0
  %1100 = vadd.xlane.f32.xlu0 %v1099
  %v1101 = vpop.xlane.xlu0 %1100
  %v1102 = vsel %vm81, %v1093, 0.0
  %1103 = vadd.xlane.f32.xlu0 %v1102
  %v1104 = vpop.xlane.xlu0 %1103
  %v1105 = vsel %vm81, %v1094, 0.0
  %1106 = vadd.xlane.f32.xlu0 %v1105
  %v1107 = vpop.xlane.xlu0 %1106
  %v1108 = vsel %vm81, %v1095, 0.0
  %1109 = vadd.xlane.f32.xlu0 %v1108
  %v1110 = vpop.xlane.xlu0 %1109
  %v1111 = vmul.f32 %v1098, %v1085
  %v1112 = vmul.f32 %v1101, %v1085
  %v1113 = vmul.f32 %v1104, %v1085
  %v1114 = vmul.f32 %v1107, %v1085
  %v1115 = vmul.f32 %v1110, %v1085
  %v1116 = vsub.f32 %v1059, %v1086
  %v1117 = vsub.f32 %v1060, %v1087
  %v1118 = vsub.f32 %v1061, %v1088
  %v1119 = vsub.f32 %v1062, %v1089
  %v1120 = vsub.f32 %v1063, %v1090
  %v1121 = vmul.f32 %v1086, %v1086
  %v1122 = vmul.f32 %v1087, %v1087
  %v1123 = vmul.f32 %v1088, %v1088
  %v1124 = vmul.f32 %v1089, %v1089
  %v1125 = vmul.f32 %v1090, %v1090
  %v1126 = vsub.f32 %v1111, %v1121
  %v1127 = vsub.f32 %v1112, %v1122
  %v1128 = vsub.f32 %v1113, %v1123
  %v1129 = vsub.f32 %v1114, %v1124
  %v1130 = vsub.f32 %v1115, %v1125
  %v1131 = vadd.f32 %v1126, 1e-05
  %v1132 = vadd.f32 %v1127, 1e-05
  %v1133 = vadd.f32 %v1128, 1e-05
  %v1134 = vadd.f32 %v1129, 1e-05
  %v1135 = vadd.f32 %v1130, 1e-05
  %v1136 = vrsqrt.pop %v1131
  %v1137 = vmul.f32 %v1136, %v1131
  %v1138 = vmul.f32 %v1137, %v1136
  %v1139 = vmul.f32 0.5, %v1138
  %v1140 = vsub.f32 1.5, %v1139
  %v1141 = vmul.f32 %v1136, %v1140
  %vm1142 = vweird.f32 %v1131
  %vm1143 = vweird.f32 %v1136
  %vm1144 = vmor %vm1142, %vm1143
  %v1145 = vsel %vm1144, %v1136, %v1141
  %v1146 = vrsqrt.pop %v1132
  %v1147 = vmul.f32 %v1146, %v1132
  %v1148 = vmul.f32 %v1147, %v1146
  %v1149 = vmul.f32 0.5, %v1148
  %v1150 = vsub.f32 1.5, %v1149
  %v1151 = vmul.f32 %v1146, %v1150
  %vm1152 = vweird.f32 %v1132
  %vm1153 = vweird.f32 %v1146
  %vm1154 = vmor %vm1152, %vm1153
  %v1155 = vsel %vm1154, %v1146, %v1151
  %v1156 = vrsqrt.pop %v1133
  %v1157 = vmul.f32 %v1156, %v1133
  %v1158 = vmul.f32 %v1157, %v1156
  %v1159 = vmul.f32 0.5, %v1158
  %v1160 = vsub.f32 1.5, %v1159
  %v1161 = vmul.f32 %v1156, %v1160
  %vm1162 = vweird.f32 %v1133
  %vm1163 = vweird.f32 %v1156
  %vm1164 = vmor %vm1162, %vm1163
  %v1165 = vsel %vm1164, %v1156, %v1161
  %v1166 = vrsqrt.pop %v1134
  %v1167 = vmul.f32 %v1166, %v1134
  %v1168 = vmul.f32 %v1167, %v1166
  %v1169 = vmul.f32 0.5, %v1168
  %v1170 = vsub.f32 1.5, %v1169
  %v1171 = vmul.f32 %v1166, %v1170
  %vm1172 = vweird.f32 %v1134
  %vm1173 = vweird.f32 %v1166
  %vm1174 = vmor %vm1172, %vm1173
  %v1175 = vsel %vm1174, %v1166, %v1171
  %v1176 = vrsqrt.pop %v1135
  %v1177 = vmul.f32 %v1176, %v1135
  %v1178 = vmul.f32 %v1177, %v1176
  %v1179 = vmul.f32 0.5, %v1178
  %v1180 = vsub.f32 1.5, %v1179
  %v1181 = vmul.f32 %v1176, %v1180
  %vm1182 = vweird.f32 %v1135
  %vm1183 = vweird.f32 %v1176
  %vm1184 = vmor %vm1182, %vm1183
  %v1185 = vsel %vm1184, %v1176, %v1181
  %v1186 = vmul.f32 %v1116, %v1145
  %v1187 = vmul.f32 %v1117, %v1155
  %v1188 = vmul.f32 %v1118, %v1165
  %v1189 = vmul.f32 %v1119, %v1175
  %v1190 = vmul.f32 %v1120, %v1185
  %v1191 = vld [vmem:[%s8] sm:$0x1]
  %v1193 = vperm.slane %v1191, 0
  %v1195 = vmul.f32 %v1186, %v1193
  %v1196 = vmul.f32 %v1187, %v1193
  %v1197 = vmul.f32 %v1188, %v1193
  %v1198 = vmul.f32 %v1189, %v1193
  %v1199 = vmul.f32 %v1190, %v1193
  %v1200 = vld [vmem:[%s9] sm:$0x1]
  %v1202 = vperm.slane %v1200, 0
  %v1204 = vadd.f32 %v1195, %v1202
  %v1205 = vadd.f32 %v1196, %v1202
  %v1206 = vadd.f32 %v1197, %v1202
  %v1207 = vadd.f32 %v1198, %v1202
  %v1208 = vadd.f32 %v1199, %v1202
  %v1209 = vld [vmem:[%s10] sm:$0xff]
  %v1210 = vld [vmem:[%s10 + $0x8] sm:$0xff]
  %v1211 = vld [vmem:[%s10 + $0x10] sm:$0xff]
  %v1212 = vld [vmem:[%s10 + $0x18] sm:$0xff]
  %v1214 = vsel %vm81, %v1204, 0
  %v1217 = vsel %vm81, %v1205, 0
  %v1220 = vsel %vm81, %v1206, 0
  %v1223 = vsel %vm81, %v1207, 0
  %v1226 = vsel %vm81, %v1208, 0
  %1228 = vmatpush.msra.mxu0 0.0
  %1229 = vmatpush.msra.mxu0 0.0
  %1230 = vmatpush.msra.mxu0 0.0
  %1231 = vmatpush.msra.mxu0 0.0
  %1232 = vmatpush.msra.mxu0 0.0
  %1233 = vmatpush.msra.mxu0 0.0
  %1234 = vmatpush.msra.mxu0 0.0
  %1235 = vmatpush.msra.mxu0 0.0
  %1236 = vmatpush.msra.mxu0 0.0
  %1237 = vmatpush.msra.mxu0 0.0
  %1238 = vmatpush.msra.mxu0 0.0
  %1239 = vmatpush.msra.mxu0 0.0
  %1240 = vmatpush.msra.mxu0 %v1212
  %1241 = vmatpush.msra.mxu0 %v1211
  %1242 = vmatpush.msra.mxu0 %v1210
  %1243 = vmatpush.msra.mxu0 %v1209
  %1244 = vmatmul.f32.gmra.mxu0 %v1214
  %v1245 = vpop.f32.mrf.mxu0
  %v1246 = vadd.f32 %v243, %v1245
  %1247 = vmatmul.f32.gmra.mxu0 %v1217
  %v1248 = vpop.f32.mrf.mxu0
  %v1249 = vadd.f32 %v246, %v1248
  %1250 = vmatmul.f32.gmra.mxu0 %v1220
  %v1251 = vpop.f32.mrf.mxu0
  %v1252 = vadd.f32 %v249, %v1251
  %1253 = vmatmul.f32.gmra.mxu0 %v1223
  %v1254 = vpop.f32.mrf.mxu0
  %v1255 = vadd.f32 %v252, %v1254
  %1256 = vmatmul.f32.gmra.mxu0 %v1226
  %v1257 = vpop.f32.mrf.mxu0
  %v1258 = vadd.f32 %v255, %v1257
  %1259 = vdwg.mxu0
  %v1260 = vld [vmem:[%s11] sm:$0x1]
  %v1262 = vperm.slane %v1260, 0
  %v1264 = vadd.f32 %v1246, %v1262
  %v1265 = vadd.f32 %v1249, %v1262
  %v1266 = vadd.f32 %v1252, %v1262
  %v1267 = vadd.f32 %v1255, %v1262
  %v1268 = vadd.f32 %v1258, %v1262
  %vm1269 = vcmp.gt.f32.partialorder %v1264, 0.0
  %vm1270 = vcmp.gt.f32.partialorder %v1265, 0.0
  %vm1271 = vcmp.gt.f32.partialorder %v1266, 0.0
  %vm1272 = vcmp.gt.f32.partialorder %v1267, 0.0
  %vm1273 = vcmp.gt.f32.partialorder %v1268, 0.0
  %v1274 = vmul.f32 %v1264, 0.01
  %v1275 = vmul.f32 %v1265, 0.01
  %v1276 = vmul.f32 %v1266, 0.01
  %v1277 = vmul.f32 %v1267, 0.01
  %v1278 = vmul.f32 %v1268, 0.01
  %v1279 = vsel %vm1269, %v1264, %v1274
  %v1280 = vsel %vm1270, %v1265, %v1275
  %v1281 = vsel %vm1271, %v1266, %v1276
  %v1282 = vsel %vm1272, %v1267, %v1277
  %v1283 = vsel %vm1273, %v1268, %v1278
  %1284 = vst.msk [vmem:[%s12] sm:$0xff] %vm81, %v1279
  %1285 = vst.msk [vmem:[%s12 + $0x8] sm:$0xff] %vm81, %v1280
  %1286 = vst.msk [vmem:[%s12 + $0x10] sm:$0xff] %vm81, %v1281
  %1287 = vst.msk [vmem:[%s12 + $0x18] sm:$0xff] %vm81, %v1282
  %1288 = vst.msk [vmem:[%s12 + $0x20] sm:$0xff] %vm81, %v1283
  // Predicated region
  $region50: #{tgan_forward.2} parent=0 // pred_check
    _
  $region51: #{tgan_forward.2} parent=0 // pred_check_branch
    %1290 = sbr.rel (0) target = $region53
  $region52: #{tgan_forward.2} parent=0 // pred_region
    _
  $region53: #{tgan_forward.2} parent=0 // pred_fallthru
    _
  // Predicated region
  $region54: #{tgan_forward.2} parent=0 // pred_check
    _
  $region55: #{tgan_forward.2} parent=0 // pred_check_branch
    %1292 = sbr.rel (0) target = $region57
  $region56: #{tgan_forward.2} parent=0 // pred_region
    _
  $region57: #{tgan_forward.2} parent=0 // pred_fallthru
    _

// kernel: tgan_forward.3
$region0: #{tgan_forward.3}
  #allocation0 [shape = 'u32[]', space=smem, size = 0x4, offset = 0x4, fixed_abs, tag = 'smem constant byte address 0x4 - core index']
  #allocation1 [shape = 'u32[72,128]{1,0:T(1,128)}', space=vmem, size = 0x9000, scoped, tag = 'internal scratch']
  %s0 = inlined_call_operand.vmem [shape: f32[8,32], index: 0, kind: input, shape index: {}]
  %s1 = inlined_call_operand.vmem [shape: f32[8,256], index: 1, kind: input, shape index: {}]
  %s2 = inlined_call_operand.vmem [shape: f32[8,8], index: 2, kind: input, shape index: {}]
  %s3 = inlined_call_operand.vmem [shape: f32[32,544], index: 3, kind: input, shape index: {}]
  %s4 = inlined_call_operand.vmem [shape: f32[256,8], index: 4, kind: input, shape index: {}]
  %s5 = inlined_call_operand.vmem [shape: f32[8,256], index: 5, kind: input, shape index: {}]
  %s6 = inlined_call_operand.vmem [shape: f32[512,32], index: 6, kind: input, shape index: {}]
  %s7 = inlined_call_operand.vmem [shape: f32[1,32], index: 7, kind: input, shape index: {}]
  %s8 = inlined_call_operand.vmem [shape: f32[1,32], index: 8, kind: input, shape index: {}]
  %s9 = inlined_call_operand.vmem [shape: f32[1,32], index: 9, kind: input, shape index: {}]
  %s10 = inlined_call_operand.vmem [shape: f32[32,32], index: 10, kind: input, shape index: {}]
  %s11 = inlined_call_operand.vmem [shape: f32[1,32], index: 11, kind: input, shape index: {}]
  %s12 = inlined_call_operand.vmem [shape: f32[8,32], index: 12, kind: output, shape index: {}]
  %s13 = sld [smem:[#allocation0]]
  $region58: #{tgan_forward.3} parent=0
    _
  %s15 = ssub.s32 1, %s13
  %s16 = scalar_select 0, %s15, %s13
  // Predicated region
  $region2: #{tgan_forward.3} parent=0 // pred_check
    _
  $region3: #{tgan_forward.3} parent=0 // pred_check_branch
    %18 = sbr.rel (0) target = $region5
  $region4: #{tgan_forward.3} parent=0 // pred_region
    _
  $region5: #{tgan_forward.3} parent=0 // pred_fallthru
    _
  // Predicated region
  $region6: #{tgan_forward.3} parent=0 // pred_check
    _
  $region7: #{tgan_forward.3} parent=0 // pred_check_branch
    %20 = sbr.rel (0) target = $region9
  $region8: #{tgan_forward.3} parent=0 // pred_region
    _
  $region9: #{tgan_forward.3} parent=0 // pred_fallthru
    _
  // Predicated region
  $region10: #{tgan_forward.3} parent=0 // pred_check
    _
  $region11: #{tgan_forward.3} parent=0 // pred_check_branch
    %22 = sbr.rel (0) target = $region13
  $region12: #{tgan_forward.3} parent=0 // pred_region
    _
  $region13: #{tgan_forward.3} parent=0 // pred_fallthru
    _
  // Predicated region
  $region14: #{tgan_forward.3} parent=0 // pred_check
    _
  $region15: #{tgan_forward.3} parent=0 // pred_check_branch
    %24 = sbr.rel (0) target = $region17
  $region16: #{tgan_forward.3} parent=0 // pred_region
    _
  $region17: #{tgan_forward.3} parent=0 // pred_fallthru
    _
  // Predicated region
  $region18: #{tgan_forward.3} parent=0 // pred_check
    _
  $region19: #{tgan_forward.3} parent=0 // pred_check_branch
    %26 = sbr.rel (0) target = $region21
  $region20: #{tgan_forward.3} parent=0 // pred_region
    _
  $region21: #{tgan_forward.3} parent=0 // pred_fallthru
    _
  // Predicated region
  $region22: #{tgan_forward.3} parent=0 // pred_check
    _
  $region23: #{tgan_forward.3} parent=0 // pred_check_branch
    %28 = sbr.rel (0) target = $region25
  $region24: #{tgan_forward.3} parent=0 // pred_region
    _
  $region25: #{tgan_forward.3} parent=0 // pred_fallthru
    _
  // Predicated region
  $region26: #{tgan_forward.3} parent=0 // pred_check
    _
  $region27: #{tgan_forward.3} parent=0 // pred_check_branch
    %30 = sbr.rel (0) target = $region29
  $region28: #{tgan_forward.3} parent=0 // pred_region
    _
  $region29: #{tgan_forward.3} parent=0 // pred_fallthru
    _
  // Predicated region
  $region30: #{tgan_forward.3} parent=0 // pred_check
    _
  $region31: #{tgan_forward.3} parent=0 // pred_check_branch
    %32 = sbr.rel (0) target = $region33
  $region32: #{tgan_forward.3} parent=0 // pred_region
    _
  $region33: #{tgan_forward.3} parent=0 // pred_fallthru
    _
  // Predicated region
  $region34: #{tgan_forward.3} parent=0 // pred_check
    _
  $region35: #{tgan_forward.3} parent=0 // pred_check_branch
    %34 = sbr.rel (0) target = $region37
  $region36: #{tgan_forward.3} parent=0 // pred_region
    _
  $region37: #{tgan_forward.3} parent=0 // pred_fallthru
    _
  // Predicated region
  $region38: #{tgan_forward.3} parent=0 // pred_check
    _
  $region39: #{tgan_forward.3} parent=0 // pred_check_branch
    %36 = sbr.rel (0) target = $region41
  $region40: #{tgan_forward.3} parent=0 // pred_region
    _
  $region41: #{tgan_forward.3} parent=0 // pred_fallthru
    _
  // Predicated region
  $region42: #{tgan_forward.3} parent=0 // pred_check
    _
  $region43: #{tgan_forward.3} parent=0 // pred_check_branch
    %38 = sbr.rel (0) target = $region45
  $region44: #{tgan_forward.3} parent=0 // pred_region
    _
  $region45: #{tgan_forward.3} parent=0 // pred_fallthru
    _
  // Predicated region
  $region46: #{tgan_forward.3} parent=0 // pred_check
    _
  $region47: #{tgan_forward.3} parent=0 // pred_check_branch
    %40 = sbr.rel (0) target = $region49
  $region48: #{tgan_forward.3} parent=0 // pred_region
    _
  $region49: #{tgan_forward.3} parent=0 // pred_fallthru
    _
  %v41 = vld [vmem:[%s0] sm:$0xff]
  %v42 = vld [vmem:[%s1] sm:$0xff]
  %v43 = vld [vmem:[%s1 + $0x8] sm:$0xff]
  %v44 = vld [vmem:[%s2] sm:$0xff]
  %v45 = vld [vmem:[%s3] sm:$0xff]
  %v46 = vld [vmem:[%s3 + $0x8] sm:$0xff]
  %v47 = vld [vmem:[%s3 + $0x10] sm:$0xff]
  %v48 = vld [vmem:[%s3 + $0x18] sm:$0xff]
  %v49 = vld [vmem:[%s3 + $0x20] sm:$0xff]
  %v50 = vld [vmem:[%s3 + $0x28] sm:$0xff]
  %v51 = vld [vmem:[%s3 + $0x30] sm:$0xff]
  %v52 = vld [vmem:[%s3 + $0x38] sm:$0xff]
  %v53 = vld [vmem:[%s3 + $0x40] sm:$0xff]
  %v54 = vld [vmem:[%s3 + $0x48] sm:$0xff]
  %v55 = vld [vmem:[%s3 + $0x50] sm:$0xff]
  %v56 = vld [vmem:[%s3 + $0x58] sm:$0xff]
  %v57 = vld [vmem:[%s3 + $0x60] sm:$0xff]
  %v58 = vld [vmem:[%s3 + $0x68] sm:$0xff]
  %v59 = vld [vmem:[%s3 + $0x70] sm:$0xff]
  %v60 = vld [vmem:[%s3 + $0x78] sm:$0xff]
  %v61 = vld [vmem:[%s3 + $0x80] sm:$0xff]
  %v62 = vld [vmem:[%s3 + $0x88] sm:$0xff]
  %v63 = vld [vmem:[%s3 + $0x90] sm:$0xff]
  %v64 = vld [vmem:[%s3 + $0x98] sm:$0xff]
  %vm65 = vcmask 261120
  %v67 = vsel %vm65, %v41, 0
  %69 = vmatpush.msra.mxu0 0.0
  %70 = vmatpush.msra.mxu0 0.0
  %71 = vmatpush.msra.mxu0 0.0
  %72 = vmatpush.msra.mxu0 0.0
  %73 = vmatpush.msra.mxu0 0.0
  %74 = vmatpush.msra.mxu0 0.0
  %75 = vmatpush.msra.mxu0 0.0
  %76 = vmatpush.msra.mxu0 0.0
  %77 = vmatpush.msra.mxu0 0.0
  %78 = vmatpush.msra.mxu0 0.0
  %79 = vmatpush.msra.mxu0 0.0
  %80 = vmatpush.msra.mxu0 0.0
  %81 = vmatpush.msra.mxu0 %v60
  %82 = vmatpush.msra.mxu0 %v55
  %83 = vmatpush.msra.mxu0 %v50
  %84 = vmatpush.msra.mxu0 %v45
  %85 = vmatmul.f32.gmra.mxu0 %v67
  %v86 = vpop.f32.mrf.mxu0
  %v87 = vadd.f32 0.0, %v86
  %88 = vdwg.mxu0
  %89 = vmatpush.msra.mxu0 0.0
  %90 = vmatpush.msra.mxu0 0.0
  %91 = vmatpush.msra.mxu0 0.0
  %92 = vmatpush.msra.mxu0 0.0
  %93 = vmatpush.msra.mxu0 0.0
  %94 = vmatpush.msra.mxu0 0.0
  %95 = vmatpush.msra.mxu0 0.0
  %96 = vmatpush.msra.mxu0 0.0
  %97 = vmatpush.msra.mxu0 0.0
  %98 = vmatpush.msra.mxu0 0.0
  %99 = vmatpush.msra.mxu0 0.0
  %100 = vmatpush.msra.mxu0 0.0
  %101 = vmatpush.msra.mxu0 %v61
  %102 = vmatpush.msra.mxu0 %v56
  %103 = vmatpush.msra.mxu0 %v51
  %104 = vmatpush.msra.mxu0 %v46
  %105 = vmatmul.f32.gmra.mxu0 %v67
  %v106 = vpop.f32.mrf.mxu0
  %v107 = vadd.f32 0.0, %v106
  %108 = vdwg.mxu0
  %109 = vmatpush.msra.mxu0 0.0
  %110 = vmatpush.msra.mxu0 0.0
  %111 = vmatpush.msra.mxu0 0.0
  %112 = vmatpush.msra.mxu0 0.0
  %113 = vmatpush.msra.mxu0 0.0
  %114 = vmatpush.msra.mxu0 0.0
  %115 = vmatpush.msra.mxu0 0.0
  %116 = vmatpush.msra.mxu0 0.0
  %117 = vmatpush.msra.mxu0 0.0
  %118 = vmatpush.msra.mxu0 0.0
  %119 = vmatpush.msra.mxu0 0.0
  %120 = vmatpush.msra.mxu0 0.0
  %121 = vmatpush.msra.mxu0 %v62
  %122 = vmatpush.msra.mxu0 %v57
  %123 = vmatpush.msra.mxu0 %v52
  %124 = vmatpush.msra.mxu0 %v47
  %125 = vmatmul.f32.gmra.mxu0 %v67
  %v126 = vpop.f32.mrf.mxu0
  %v127 = vadd.f32 0.0, %v126
  %128 = vdwg.mxu0
  %129 = vmatpush.msra.mxu0 0.0
  %130 = vmatpush.msra.mxu0 0.0
  %131 = vmatpush.msra.mxu0 0.0
  %132 = vmatpush.msra.mxu0 0.0
  %133 = vmatpush.msra.mxu0 0.0
  %134 = vmatpush.msra.mxu0 0.0
  %135 = vmatpush.msra.mxu0 0.0
  %136 = vmatpush.msra.mxu0 0.0
  %137 = vmatpush.msra.mxu0 0.0
  %138 = vmatpush.msra.mxu0 0.0
  %139 = vmatpush.msra.mxu0 0.0
  %140 = vmatpush.msra.mxu0 0.0
  %141 = vmatpush.msra.mxu0 %v63
  %142 = vmatpush.msra.mxu0 %v58
  %143 = vmatpush.msra.mxu0 %v53
  %144 = vmatpush.msra.mxu0 %v48
  %145 = vmatmul.f32.gmra.mxu0 %v67
  %v146 = vpop.f32.mrf.mxu0
  %v147 = vadd.f32 0.0, %v146
  %148 = vdwg.mxu0
  %149 = vmatpush.msra.mxu0 0.0
  %150 = vmatpush.msra.mxu0 0.0
  %151 = vmatpush.msra.mxu0 0.0
  %152 = vmatpush.msra.mxu0 0.0
  %153 = vmatpush.msra.mxu0 0.0
  %154 = vmatpush.msra.mxu0 0.0
  %155 = vmatpush.msra.mxu0 0.0
  %156 = vmatpush.msra.mxu0 0.0
  %157 = vmatpush.msra.mxu0 0.0
  %158 = vmatpush.msra.mxu0 0.0
  %159 = vmatpush.msra.mxu0 0.0
  %160 = vmatpush.msra.mxu0 0.0
  %161 = vmatpush.msra.mxu0 %v64
  %162 = vmatpush.msra.mxu0 %v59
  %163 = vmatpush.msra.mxu0 %v54
  %164 = vmatpush.msra.mxu0 %v49
  %165 = vmatmul.f32.gmra.mxu0 %v67
  %v166 = vpop.f32.mrf.mxu0
  %v167 = vadd.f32 0.0, %v166
  %168 = vdwg.mxu0
  %v169 = vmul.f32 %v42, %v87
  %v170 = vmul.f32 %v43, %v107
  %v171 = vld [vmem:[%s4] sm:$0xff]
  %v172 = vld [vmem:[%s4 + $0x8] sm:$0xff]
  %v173 = vld [vmem:[%s4 + $0x10] sm:$0xff]
  %v174 = vld [vmem:[%s4 + $0x18] sm:$0xff]
  %v175 = vld [vmem:[%s4 + $0x20] sm:$0xff]
  %v176 = vld [vmem:[%s4 + $0x28] sm:$0xff]
  %v177 = vld [vmem:[%s4 + $0x30] sm:$0xff]
  %v178 = vld [vmem:[%s4 + $0x38] sm:$0xff]
  %v179 = vld [vmem:[%s4 + $0x40] sm:$0xff]
  %v180 = vld [vmem:[%s4 + $0x48] sm:$0xff]
  %v181 = vld [vmem:[%s4 + $0x50] sm:$0xff]
  %v182 = vld [vmem:[%s4 + $0x58] sm:$0xff]
  %v183 = vld [vmem:[%s4 + $0x60] sm:$0xff]
  %v184 = vld [vmem:[%s4 + $0x68] sm:$0xff]
  %v185 = vld [vmem:[%s4 + $0x70] sm:$0xff]
  %v186 = vld [vmem:[%s4 + $0x78] sm:$0xff]
  %v187 = vld [vmem:[%s4 + $0x80] sm:$0xff]
  %v188 = vld [vmem:[%s4 + $0x88] sm:$0xff]
  %v189 = vld [vmem:[%s4 + $0x90] sm:$0xff]
  %v190 = vld [vmem:[%s4 + $0x98] sm:$0xff]
  %v191 = vld [vmem:[%s4 + $0xa0] sm:$0xff]
  %v192 = vld [vmem:[%s4 + $0xa8] sm:$0xff]
  %v193 = vld [vmem:[%s4 + $0xb0] sm:$0xff]
  %v194 = vld [vmem:[%s4 + $0xb8] sm:$0xff]
  %v195 = vld [vmem:[%s4 + $0xc0] sm:$0xff]
  %v196 = vld [vmem:[%s4 + $0xc8] sm:$0xff]
  %v197 = vld [vmem:[%s4 + $0xd0] sm:$0xff]
  %v198 = vld [vmem:[%s4 + $0xd8] sm:$0xff]
  %v199 = vld [vmem:[%s4 + $0xe0] sm:$0xff]
  %v200 = vld [vmem:[%s4 + $0xe8] sm:$0xff]
  %v201 = vld [vmem:[%s4 + $0xf0] sm:$0xff]
  %v202 = vld [vmem:[%s4 + $0xf8] sm:$0xff]
  %203 = vmatpush.msra.mxu0 %v186
  %204 = vmatpush.msra.mxu0 %v185
  %205 = vmatpush.msra.mxu0 %v184
  %206 = vmatpush.msra.mxu0 %v183
  %207 = vmatpush.msra.mxu0 %v182
  %208 = vmatpush.msra.mxu0 %v181
  %209 = vmatpush.msra.mxu0 %v180
  %210 = vmatpush.msra.mxu0 %v179
  %211 = vmatpush.msra.mxu0 %v178
  %212 = vmatpush.msra.mxu0 %v177
  %213 = vmatpush.msra.mxu0 %v176
  %214 = vmatpush.msra.mxu0 %v175
  %215 = vmatpush.msra.mxu0 %v174
  %216 = vmatpush.msra.mxu0 %v173
  %217 = vmatpush.msra.mxu0 %v172
  %218 = vmatpush.msra.mxu0 %v171
  %219 = vmatmul.f32.gmra.mxu0 %v169
  %v220 = vpop.f32.mrf.mxu0
  %v221 = vadd.f32 %v44, %v220
  %222 = vdwg.mxu0
  %223 = vmatpush.msra.mxu0 %v202
  %224 = vmatpush.msra.mxu0 %v201
  %225 = vmatpush.msra.mxu0 %v200
  %226 = vmatpush.msra.mxu0 %v199
  %227 = vmatpush.msra.mxu0 %v198
  %228 = vmatpush.msra.mxu0 %v197
  %229 = vmatpush.msra.mxu0 %v196
  %230 = vmatpush.msra.mxu0 %v195
  %231 = vmatpush.msra.mxu0 %v194
  %232 = vmatpush.msra.mxu0 %v193
  %233 = vmatpush.msra.mxu0 %v192
  %234 = vmatpush.msra.mxu0 %v191
  %235 = vmatpush.msra.mxu0 %v190
  %236 = vmatpush.msra.mxu0 %v189
  %237 = vmatpush.msra.mxu0 %v188
  %238 = vmatpush.msra.mxu0 %v187
  %239 = vmatmul.f32.gmra.mxu0 %v170
  %v240 = vpop.f32.mrf.mxu0
  %v241 = vadd.f32 %v221, %v240
  %242 = vdwg.mxu0
  %vm243 = vcmask 64512
  %v244 = vsel %vm243, %v241, -inf
  %245 = vmax.xlane.f32.xlu0 %v244
  %v246 = vpop.xlane.xlu0 %245
  %v247 = vsub.f32 %v241, %v246
  %v248 = vmul.f32 %v247, 1.442695
  %v249 = vpow.pop %v248
  %v250 = vsel %vm243, %v249, 0.0
  %251 = vadd.xlane.f32.xlu0 %v250
  %v252 = vpop.xlane.xlu0 %251
  %v253 = vrcp.pop %v252
  %v254 = vmul.f32 %v252, %v253
  %v255 = vsub.f32 1.0, %v254
  %v256 = vmul.f32 %v253, %v255
  %v257 = vadd.f32 %v253, %v256
  %vm258 = vweird.f32 %v252
  %vm259 = vweird.f32 %v253
  %vm260 = vmor %vm258, %vm259
  %v261 = vsel %vm260, %v253, %v257
  %v262 = vand.u32 2147483647, %v252
  %vm263 = vcmp.eq.f32.partialorder %v262, 8.507059e+37
  %v264 = vand.u32 %v252, 2147483648
  %v265 = vor.u32 1.1754944e-38, %v264
  %v266 = vsel %vm263, %v265, %v261
  %v267 = vmul.f32 %v249, %v266
  %v268 = vld [vmem:[%s5] sm:$0xff]
  %v269 = vld [vmem:[%s5 + $0x8] sm:$0xff]
  %v271 = vsel %vm243, %v267, 0
  %273 = vmatpush.msra.mxu0 0.0
  %274 = vmatpush.msra.mxu0 0.0
  %275 = vmatpush.msra.mxu0 0.0
  %276 = vmatpush.msra.mxu0 0.0
  %277 = vmatpush.msra.mxu0 0.0
  %278 = vmatpush.msra.mxu0 0.0
  %279 = vmatpush.msra.mxu0 0.0
  %280 = vmatpush.msra.mxu0 0.0
  %281 = vmatpush.msra.mxu0 0.0
  %282 = vmatpush.msra.mxu0 0.0
  %283 = vmatpush.msra.mxu0 0.0
  %284 = vmatpush.msra.mxu0 0.0
  %285 = vmatpush.msra.mxu0 0.0
  %286 = vmatpush.msra.mxu0 0.0
  %287 = vmatpush.msra.mxu0 0.0
  %288 = vmatpush.msra.mxu0 %v268
  %289 = vmatmul.f32.gmra.mxu0 %v271
  %v290 = vpop.f32.mrf.mxu0
  %v291 = vadd.f32 0.0, %v290
  %292 = vdwg.mxu0
  %293 = vmatpush.msra.mxu0 0.0
  %294 = vmatpush.msra.mxu0 0.0
  %295 = vmatpush.msra.mxu0 0.0
  %296 = vmatpush.msra.mxu0 0.0
  %297 = vmatpush.msra.mxu0 0.0
  %298 = vmatpush.msra.mxu0 0.0
  %299 = vmatpush.msra.mxu0 0.0
  %300 = vmatpush.msra.mxu0 0.0
  %301 = vmatpush.msra.mxu0 0.0
  %302 = vmatpush.msra.mxu0 0.0
  %303 = vmatpush.msra.mxu0 0.0
  %304 = vmatpush.msra.mxu0 0.0
  %305 = vmatpush.msra.mxu0 0.0
  %306 = vmatpush.msra.mxu0 0.0
  %307 = vmatpush.msra.mxu0 0.0
  %308 = vmatpush.msra.mxu0 %v269
  %309 = vmatmul.f32.gmra.mxu0 %v271
  %v310 = vpop.f32.mrf.mxu0
  %v311 = vadd.f32 0.0, %v310
  %312 = vdwg.mxu0
  %v313 = vmul.f32 %v291, %v42
  %v314 = vmul.f32 %v311, %v43
  %v315 = vld [vmem:[%s6] sm:$0xff]
  %v316 = vld [vmem:[%s6 + $0x8] sm:$0xff]
  %v317 = vld [vmem:[%s6 + $0x10] sm:$0xff]
  %v318 = vld [vmem:[%s6 + $0x18] sm:$0xff]
  %v319 = vld [vmem:[%s6 + $0x20] sm:$0xff]
  %v320 = vld [vmem:[%s6 + $0x28] sm:$0xff]
  %v321 = vld [vmem:[%s6 + $0x30] sm:$0xff]
  %v322 = vld [vmem:[%s6 + $0x38] sm:$0xff]
  %v323 = vld [vmem:[%s6 + $0x40] sm:$0xff]
  %v324 = vld [vmem:[%s6 + $0x48] sm:$0xff]
  %v325 = vld [vmem:[%s6 + $0x50] sm:$0xff]
  %v326 = vld [vmem:[%s6 + $0x58] sm:$0xff]
  %v327 = vld [vmem:[%s6 + $0x60] sm:$0xff]
  %v328 = vld [vmem:[%s6 + $0x68] sm:$0xff]
  %v329 = vld [vmem:[%s6 + $0x70] sm:$0xff]
  %v330 = vld [vmem:[%s6 + $0x78] sm:$0xff]
  %v331 = vld [vmem:[%s6 + $0x80] sm:$0xff]
  %v332 = vld [vmem:[%s6 + $0x88] sm:$0xff]
  %v333 = vld [vmem:[%s6 + $0x90] sm:$0xff]
  %v334 = vld [vmem:[%s6 + $0x98] sm:$0xff]
  %v335 = vld [vmem:[%s6 + $0xa0] sm:$0xff]
  %v336 = vld [vmem:[%s6 + $0xa8] sm:$0xff]
  %v337 = vld [vmem:[%s6 + $0xb0] sm:$0xff]
  %v338 = vld [vmem:[%s6 + $0xb8] sm:$0xff]
  %v339 = vld [vmem:[%s6 + $0xc0] sm:$0xff]
  %v340 = vld [vmem:[%s6 + $0xc8] sm:$0xff]
  %v341 = vld [vmem:[%s6 + $0xd0] sm:$0xff]
  %v342 = vld [vmem:[%s6 + $0xd8] sm:$0xff]
  %v343 = vld [vmem:[%s6 + $0xe0] sm:$0xff]
  %v344 = vld [vmem:[%s6 + $0xe8] sm:$0xff]
  %v345 = vld [vmem:[%s6 + $0xf0] sm:$0xff]
  %v346 = vld [vmem:[%s6 + $0xf8] sm:$0xff]
  %v347 = vmul.f32 %v42, %v127
  %v348 = vmul.f32 %v43, %v147
  %349 = vmatpush.msra.mxu0 %v186
  %350 = vmatpush.msra.mxu0 %v185
  %351 = vmatpush.msra.mxu0 %v184
  %352 = vmatpush.msra.mxu0 %v183
  %353 = vmatpush.msra.mxu0 %v182
  %354 = vmatpush.msra.mxu0 %v181
  %355 = vmatpush.msra.mxu0 %v180
  %356 = vmatpush.msra.mxu0 %v179
  %357 = vmatpush.msra.mxu0 %v178
  %358 = vmatpush.msra.mxu0 %v177
  %359 = vmatpush.msra.mxu0 %v176
  %360 = vmatpush.msra.mxu0 %v175
  %361 = vmatpush.msra.mxu0 %v174
  %362 = vmatpush.msra.mxu0 %v173
  %363 = vmatpush.msra.mxu0 %v172
  %364 = vmatpush.msra.mxu0 %v171
  %365 = vmatmul.f32.gmra.mxu0 %v347
  %v366 = vpop.f32.mrf.mxu0
  %v367 = vadd.f32 %v44, %v366
  %368 = vdwg.mxu0
  %369 = vmatpush.msra.mxu0 %v202
  %370 = vmatpush.msra.mxu0 %v201
  %371 = vmatpush.msra.mxu0 %v200
  %372 = vmatpush.msra.mxu0 %v199
  %373 = vmatpush.msra.mxu0 %v198
  %374 = vmatpush.msra.mxu0 %v197
  %375 = vmatpush.msra.mxu0 %v196
  %376 = vmatpush.msra.mxu0 %v195
  %377 = vmatpush.msra.mxu0 %v194
  %378 = vmatpush.msra.mxu0 %v193
  %379 = vmatpush.msra.mxu0 %v192
  %380 = vmatpush.msra.mxu0 %v191
  %381 = vmatpush.msra.mxu0 %v190
  %382 = vmatpush.msra.mxu0 %v189
  %383 = vmatpush.msra.mxu0 %v188
  %384 = vmatpush.msra.mxu0 %v187
  %385 = vmatmul.f32.gmra.mxu0 %v348
  %v386 = vpop.f32.mrf.mxu0
  %v387 = vadd.f32 %v367, %v386
  %388 = vdwg.mxu0
  %v389 = vsel %vm243, %v387, -inf
  %390 = vmax.xlane.f32.xlu0 %v389
  %v391 = vpop.xlane.xlu0 %390
  %v392 = vsub.f32 %v387, %v391
  %v393 = vmul.f32 %v392, 1.442695
  %v394 = vpow.pop %v393
  %v395 = vsel %vm243, %v394, 0.0
  %396 = vadd.xlane.f32.xlu0 %v395
  %v397 = vpop.xlane.xlu0 %396
  %v398 = vrcp.pop %v397
  %v399 = vmul.f32 %v397, %v398
  %v400 = vsub.f32 1.0, %v399
  %v401 = vmul.f32 %v398, %v400
  %v402 = vadd.f32 %v398, %v401
  %vm403 = vweird.f32 %v397
  %vm404 = vweird.f32 %v398
  %vm405 = vmor %vm403, %vm404
  %v406 = vsel %vm405, %v398, %v402
  %v407 = vand.u32 2147483647, %v397
  %vm408 = vcmp.eq.f32.partialorder %v407, 8.507059e+37
  %v409 = vand.u32 %v397, 2147483648
  %v410 = vor.u32 1.1754944e-38, %v409
  %v411 = vsel %vm408, %v410, %v406
  %v412 = vmul.f32 %v394, %v411
  %v414 = vsel %vm243, %v412, 0
  %416 = vmatpush.msra.mxu0 0.0
  %417 = vmatpush.msra.mxu0 0.0
  %418 = vmatpush.msra.mxu0 0.0
  %419 = vmatpush.msra.mxu0 0.0
  %420 = vmatpush.msra.mxu0 0.0
  %421 = vmatpush.msra.mxu0 0.0
  %422 = vmatpush.msra.mxu0 0.0
  %423 = vmatpush.msra.mxu0 0.0
  %424 = vmatpush.msra.mxu0 0.0
  %425 = vmatpush.msra.mxu0 0.0
  %426 = vmatpush.msra.mxu0 0.0
  %427 = vmatpush.msra.mxu0 0.0
  %428 = vmatpush.msra.mxu0 0.0
  %429 = vmatpush.msra.mxu0 0.0
  %430 = vmatpush.msra.mxu0 0.0
  %431 = vmatpush.msra.mxu0 %v268
  %432 = vmatmul.f32.gmra.mxu0 %v414
  %v433 = vpop.f32.mrf.mxu0
  %v434 = vadd.f32 0.0, %v433
  %435 = vdwg.mxu0
  %436 = vmatpush.msra.mxu0 0.0
  %437 = vmatpush.msra.mxu0 0.0
  %438 = vmatpush.msra.mxu0 0.0
  %439 = vmatpush.msra.mxu0 0.0
  %440 = vmatpush.msra.mxu0 0.0
  %441 = vmatpush.msra.mxu0 0.0
  %442 = vmatpush.msra.mxu0 0.0
  %443 = vmatpush.msra.mxu0 0.0
  %444 = vmatpush.msra.mxu0 0.0
  %445 = vmatpush.msra.mxu0 0.0
  %446 = vmatpush.msra.mxu0 0.0
  %447 = vmatpush.msra.mxu0 0.0
  %448 = vmatpush.msra.mxu0 0.0
  %449 = vmatpush.msra.mxu0 0.0
  %450 = vmatpush.msra.mxu0 0.0
  %451 = vmatpush.msra.mxu0 %v269
  %452 = vmatmul.f32.gmra.mxu0 %v414
  %v453 = vpop.f32.mrf.mxu0
  %v454 = vadd.f32 0.0, %v453
  %455 = vdwg.mxu0
  %v456 = vmul.f32 %v434, %v42
  %v457 = vmul.f32 %v454, %v43
  %v458 = vld [vmem:[%s6 + $0x100] sm:$0xff]
  %v459 = vld [vmem:[%s6 + $0x108] sm:$0xff]
  %v460 = vld [vmem:[%s6 + $0x110] sm:$0xff]
  %v461 = vld [vmem:[%s6 + $0x118] sm:$0xff]
  %v462 = vld [vmem:[%s6 + $0x120] sm:$0xff]
  %v463 = vld [vmem:[%s6 + $0x128] sm:$0xff]
  %v464 = vld [vmem:[%s6 + $0x130] sm:$0xff]
  %v465 = vld [vmem:[%s6 + $0x138] sm:$0xff]
  %v466 = vld [vmem:[%s6 + $0x140] sm:$0xff]
  %v467 = vld [vmem:[%s6 + $0x148] sm:$0xff]
  %v468 = vld [vmem:[%s6 + $0x150] sm:$0xff]
  %v469 = vld [vmem:[%s6 + $0x158] sm:$0xff]
  %v470 = vld [vmem:[%s6 + $0x160] sm:$0xff]
  %v471 = vld [vmem:[%s6 + $0x168] sm:$0xff]
  %v472 = vld [vmem:[%s6 + $0x170] sm:$0xff]
  %v473 = vld [vmem:[%s6 + $0x178] sm:$0xff]
  %v474 = vld [vmem:[%s6 + $0x180] sm:$0xff]
  %v475 = vld [vmem:[%s6 + $0x188] sm:$0xff]
  %v476 = vld [vmem:[%s6 + $0x190] sm:$0xff]
  %v477 = vld [vmem:[%s6 + $0x198] sm:$0xff]
  %v478 = vld [vmem:[%s6 + $0x1a0] sm:$0xff]
  %v479 = vld [vmem:[%s6 + $0x1a8] sm:$0xff]
  %v480 = vld [vmem:[%s6 + $0x1b0] sm:$0xff]
  %v481 = vld [vmem:[%s6 + $0x1b8] sm:$0xff]
  %v482 = vld [vmem:[%s6 + $0x1c0] sm:$0xff]
  %v483 = vld [vmem:[%s6 + $0x1c8] sm:$0xff]
  %v484 = vld [vmem:[%s6 + $0x1d0] sm:$0xff]
  %v485 = vld [vmem:[%s6 + $0x1d8] sm:$0xff]
  %v486 = vld [vmem:[%s6 + $0x1e0] sm:$0xff]
  %v487 = vld [vmem:[%s6 + $0x1e8] sm:$0xff]
  %v488 = vld [vmem:[%s6 + $0x1f0] sm:$0xff]
  %v489 = vld [vmem:[%s6 + $0x1f8] sm:$0xff]
  %490 = vmatpush.msra.mxu0 %v473
  %491 = vmatpush.msra.mxu0 %v472
  %492 = vmatpush.msra.mxu0 %v471
  %493 = vmatpush.msra.mxu0 %v470
  %494 = vmatpush.msra.mxu0 %v469
  %495 = vmatpush.msra.mxu0 %v468
  %496 = vmatpush.msra.mxu0 %v467
  %497 = vmatpush.msra.mxu0 %v466
  %498 = vmatpush.msra.mxu0 %v465
  %499 = vmatpush.msra.mxu0 %v464
  %500 = vmatpush.msra.mxu0 %v463
  %501 = vmatpush.msra.mxu0 %v462
  %502 = vmatpush.msra.mxu0 %v461
  %503 = vmatpush.msra.mxu0 %v460
  %504 = vmatpush.msra.mxu0 %v459
  %505 = vmatpush.msra.mxu0 %v458
  %506 = vmatmul.f32.gmra.mxu0 %v456
  %v507 = vpop.f32.mrf.mxu0
  %v508 = vadd.f32 0.0, %v507
  %509 = vdwg.mxu0
  %510 = vmatpush.msra.mxu0 %v489
  %511 = vmatpush.msra.mxu0 %v488
  %512 = vmatpush.msra.mxu0 %v487
  %513 = vmatpush.msra.mxu0 %v486
  %514 = vmatpush.msra.mxu0 %v485
  %515 = vmatpush.msra.mxu0 %v484
  %516 = vmatpush.msra.mxu0 %v483
  %517 = vmatpush.msra.mxu0 %v482
  %518 = vmatpush.msra.mxu0 %v481
  %519 = vmatpush.msra.mxu0 %v480
  %520 = vmatpush.msra.mxu0 %v479
  %521 = vmatpush.msra.mxu0 %v478
  %522 = vmatpush.msra.mxu0 %v477
  %523 = vmatpush.msra.mxu0 %v476
  %524 = vmatpush.msra.mxu0 %v475
  %525 = vmatpush.msra.mxu0 %v474
  %526 = vmatmul.f32.gmra.mxu0 %v457
  %v527 = vpop.f32.mrf.mxu0
  %v528 = vadd.f32 %v508, %v527
  %529 = vdwg.mxu0
  %530 = vmatpush.msra.mxu0 %v330
  %531 = vmatpush.msra.mxu0 %v329
  %532 = vmatpush.msra.mxu0 %v328
  %533 = vmatpush.msra.mxu0 %v327
  %534 = vmatpush.msra.mxu0 %v326
  %535 = vmatpush.msra.mxu0 %v325
  %536 = vmatpush.msra.mxu0 %v324
  %537 = vmatpush.msra.mxu0 %v323
  %538 = vmatpush.msra.mxu0 %v322
  %539 = vmatpush.msra.mxu0 %v321
  %540 = vmatpush.msra.mxu0 %v320
  %541 = vmatpush.msra.mxu0 %v319
  %542 = vmatpush.msra.mxu0 %v318
  %543 = vmatpush.msra.mxu0 %v317
  %544 = vmatpush.msra.mxu0 %v316
  %545 = vmatpush.msra.mxu0 %v315
  %546 = vmatmul.f32.gmra.mxu0 %v313
  %v547 = vpop.f32.mrf.mxu0
  %v548 = vadd.f32 %v528, %v547
  %549 = vdwg.mxu0
  %550 = vmatpush.msra.mxu0 %v346
  %551 = vmatpush.msra.mxu0 %v345
  %552 = vmatpush.msra.mxu0 %v344
  %553 = vmatpush.msra.mxu0 %v343
  %554 = vmatpush.msra.mxu0 %v342
  %555 = vmatpush.msra.mxu0 %v341
  %556 = vmatpush.msra.mxu0 %v340
  %557 = vmatpush.msra.mxu0 %v339
  %558 = vmatpush.msra.mxu0 %v338
  %559 = vmatpush.msra.mxu0 %v337
  %560 = vmatpush.msra.mxu0 %v336
  %561 = vmatpush.msra.mxu0 %v335
  %562 = vmatpush.msra.mxu0 %v334
  %563 = vmatpush.msra.mxu0 %v333
  %564 = vmatpush.msra.mxu0 %v332
  %565 = vmatpush.msra.mxu0 %v331
  %566 = vmatmul.f32.gmra.mxu0 %v314
  %v567 = vpop.f32.mrf.mxu0
  %v568 = vadd.f32 %v548, %v567
  %569 = vdwg.mxu0
  %v570 = vld [vmem:[%s7] sm:$0x1]
  %v572 = vperm.slane %v570, 0
  %v574 = vadd.f32 %v568, %v572
  %v575 = vadd.f32 %v574, %v41
  %v576 = vsel %vm65, %v575, 0.0
  %577 = vadd.xlane.f32.xlu0 %v576
  %v578 = vpop.xlane.xlu0 %577
  %v579 = vrcp.pop 32.0
  %v580 = vmul.f32 32.0, %v579
  %v581 = vsub.f32 1.0, %v580
  %v582 = vmul.f32 %v579, %v581
  %v583 = vadd.f32 %v579, %v582
  %vm584 = vweird.f32 %v579
  %v585 = vsel %vm584, %v579, %v583
  %v586 = vmul.f32 %v578, %v585
  %v587 = vmul.f32 %v575, %v575
  %v588 = vsel %vm65, %v587, 0.0
  %589 = vadd.xlane.f32.xlu0 %v588
  %v590 = vpop.xlane.xlu0 %589
  %v591 = vmul.f32 %v590, %v585
  %v592 = vsub.f32 %v575, %v586
  %v593 = vmul.f32 %v586, %v586
  %v594 = vsub.f32 %v591, %v593
  %v595 = vadd.f32 %v594, 1e-05
  %v596 = vrsqrt.pop %v595
  %v597 = vmul.f32 %v596, %v595
  %v598 = vmul.f32 %v597, %v596
  %v599 = vmul.f32 0.5, %v598
  %v600 = vsub.f32 1.5, %v599
  %v601 = vmul.f32 %v596, %v600
  %vm602 = vweird.f32 %v595
  %vm603 = vweird.f32 %v596
  %vm604 = vmor %vm602, %vm603
  %v605 = vsel %vm604, %v596, %v601
  %v606 = vmul.f32 %v592, %v605
  %v607 = vld [vmem:[%s8] sm:$0x1]
  %v609 = vperm.slane %v607, 0
  %v611 = vmul.f32 %v606, %v609
  %v612 = vld [vmem:[%s9] sm:$0x1]
  %v614 = vperm.slane %v612, 0
  %v616 = vadd.f32 %v611, %v614
  %v617 = vld [vmem:[%s10] sm:$0xff]
  %v618 = vld [vmem:[%s10 + $0x8] sm:$0xff]
  %v619 = vld [vmem:[%s10 + $0x10] sm:$0xff]
  %v620 = vld [vmem:[%s10 + $0x18] sm:$0xff]
  %v622 = vsel %vm65, %v616, 0
  %624 = vmatpush.msra.mxu0 0.0
  %625 = vmatpush.msra.mxu0 0.0
  %626 = vmatpush.msra.mxu0 0.0
  %627 = vmatpush.msra.mxu0 0.0
  %628 = vmatpush.msra.mxu0 0.0
  %629 = vmatpush.msra.mxu0 0.0
  %630 = vmatpush.msra.mxu0 0.0
  %631 = vmatpush.msra.mxu0 0.0
  %632 = vmatpush.msra.mxu0 0.0
  %633 = vmatpush.msra.mxu0 0.0
  %634 = vmatpush.msra.mxu0 0.0
  %635 = vmatpush.msra.mxu0 0.0
  %636 = vmatpush.msra.mxu0 %v620
  %637 = vmatpush.msra.mxu0 %v619
  %638 = vmatpush.msra.mxu0 %v618
  %639 = vmatpush.msra.mxu0 %v617
  %640 = vmatmul.f32.gmra.mxu0 %v622
  %v641 = vpop.f32.mrf.mxu0
  %v642 = vadd.f32 %v167, %v641
  %643 = vdwg.mxu0
  %v644 = vld [vmem:[%s11] sm:$0x1]
  %v646 = vperm.slane %v644, 0
  %v648 = vadd.f32 %v642, %v646
  %vm649 = vcmp.gt.f32.partialorder %v648, 0.0
  %v650 = vmul.f32 %v648, 0.01
  %v651 = vsel %vm649, %v648, %v650
  %652 = vst.msk [vmem:[%s12] sm:$0xff] %vm65, %v651
  // Predicated region
  $region50: #{tgan_forward.3} parent=0 // pred_check
    _
  $region51: #{tgan_forward.3} parent=0 // pred_check_branch
    %654 = sbr.rel (0) target = $region53
  $region52: #{tgan_forward.3} parent=0 // pred_region
    _
  $region53: #{tgan_forward.3} parent=0 // pred_fallthru
    _
  // Predicated region
  $region54: #{tgan_forward.3} parent=0 // pred_check
    _
  $region55: #{tgan_forward.3} parent=0 // pred_check_branch
    %656 = sbr.rel (0) target = $region57
  $region56: #{tgan_forward.3} parent=0 // pred_region
    _
  $region57: #{tgan_forward.3} parent=0 // pred_fallthru
    _

</llo_original>
